<compile_context>
chip_gen: v7x
topology: tpu7x:2x2x1
jax: 0.10.0
libtpu: 0.0.40
codegen_flags: <defaults>
</compile_context>

<pallas_src>
import jax
import jax.numpy as jnp
from jax.experimental import pallas as pl
from jax.experimental.pallas import tpu as pltpu


def _make_kernel(center_index: bool, onehot_f32: bool):
    """Returns the kernel body.  Signature depends on center_index (the ii
    stream is not passed at all in the fast path)."""

    def kernel(*refs):
        if center_index:
            xs_ref, jj_ref, wx_ref, wr_ref, b_ref, o_ref = refs
            ii = None
        else:
            xs_ref, ii_ref, jj_ref, wx_ref, wr_ref, b_ref, o_ref = refs
            ii = ii_ref[0]                                   # (K, TN) i32

        x_src = xs_ref[0]                                    # (C, Np) bf16
        jj = jj_ref[0]                                       # (K, TN) i32
        C, Np = x_src.shape
        K, TN = jj.shape

        # Node-id iota, hoisted out of the per-k loop (rows = node id).
        iota_n = jax.lax.broadcasted_iota(jnp.int32, (Np, TN), 0)

        def onehot_diff(k):
            # column t = onehot(jj[k,t]) - onehot(ii[k,t]); exact in bf16.
            oh_j = (iota_n == jj[k:k + 1, :])
            if center_index:
                return oh_j.astype(jnp.bfloat16)             # x_i handled later
            oh_i = (iota_n == ii[k:k + 1, :])
            if onehot_f32:                                   # v5e: f32-only VPU
                return (oh_j.astype(jnp.float32)
                        - oh_i.astype(jnp.float32)).astype(jnp.bfloat16)
            return oh_j.astype(jnp.bfloat16) - oh_i.astype(jnp.bfloat16)

        # Per-k streamed gather-as-matmul with max accumulation.  K is a small
        # compile-time constant, so a static unrolled loop is fine; each d_k
        # dies right after its dot (no K-stacked temporaries).
        rel = None
        for k in range(K):
            rel_k = jnp.dot(x_src, onehot_diff(k),
                            preferred_element_type=jnp.float32)     # (C, TN)
            rel = rel_k if rel is None else jnp.maximum(rel, rel_k)

        # Self features sliced from the resident gather source (no extra DMA).
        if Np == TN:
            x_tile = x_src.astype(jnp.float32)               # (C, TN)
        else:
            start = pl.multiple_of(pl.program_id(1) * TN, 128)
            x_tile = xs_ref[0, :, pl.ds(start, TN)].astype(jnp.float32)

        if center_index:
            # max_k(x_j - x_i) == max_k(x_j) - x_i when x_i is the center node.
            rel = rel - x_tile

        # Fused 1x1 conv + bias + ReLU as two dots against static W halves
        # (avoids materializing a (2C, TN) concat every grid step).
        out = (jnp.dot(wx_ref[...], x_tile, preferred_element_type=jnp.float32)
               + jnp.dot(wr_ref[...], rel, preferred_element_type=jnp.float32)
               + b_ref[...])                                 # (Cout, TN)
        o_ref[0] = jnp.maximum(out, 0.0).astype(o_ref.dtype)

    return kernel


def _pick_node_tile(n_padded, target):
    """Largest multiple of 128 dividing n_padded and <= target (n_padded is
    always a multiple of 128 after wrapper padding, so this never falls back
    to an unaligned tile)."""
    if n_padded <= target:
        return n_padded
    t = (target // 128) * 128
    while t > 128:
        if n_padded % t == 0:
            return t
        t -= 128
    return 128


def _vmem_limit_bytes(is_v7x):
    """Request ~75% of physical VMEM (never the whole thing)."""
    try:
        cap = int(pltpu.get_tpu_info().vmem_capacity_bytes)
    except Exception:
        cap = (64 if is_v7x else 128) * 1024 * 1024
    return max(16 * 1024 * 1024, (cap * 3) // 4)


def mrconv1d(x, edge_index, w, bias, *, node_tile=None, center_index=None):
    """x: (B, C, N) f32;  edge_index: (2, B, N, K) int;
       w: (Cout, 2C) f32 (PyTorch Conv1d (out, in) layout);  bias: (Cout,) f32.
       Returns (B, Cout, N) f32.

       center_index: pass True when edge_index[1][b, n, k] == n (the usual
       ViG/DenseKnn pattern) to take the fast path; if None it is detected
       once on the host (avoid None under jit)."""
    B, C, N = x.shape
    K = edge_index.shape[-1]
    Cout = w.shape[0]

    kind = jax.devices()[0].device_kind.lower()
    is_v7 = ("v7" in kind) or ("7x" in kind)
    # v5e/v5p/v4: no bf16 VPU -> build one-hot diff via f32 subtract.
    onehot_f32 = any(s in kind for s in ("v2", "v3", "v4", "v5"))

    if node_tile is None:
        if is_v7:
            node_tile = 256                  # 64 MiB VMEM
        elif onehot_f32:
            node_tile = 256                  # v5e: 128-wide MXU arrays
        else:
            node_tile = 1024 if C <= 64 else 512   # v6e: 128 MiB VMEM

    # Clamp indices (JAX gather semantics; PyTorch would error on OOB) and lay
    # them out as (B, K, N) so each per-k index row is lane-resident.
    idx_j = jnp.clip(edge_index[0].astype(jnp.int32), 0, N - 1)     # (B, N, K)
    idx_i = jnp.clip(edge_index[1].astype(jnp.int32), 0, N - 1)

    if center_index is None:
        # One-time host check (don't rely on this under jit).
        center_index = bool(jnp.all(
            idx_i == jnp.arange(N, dtype=jnp.int32)[None, :, None]))

    idx_j = jnp.transpose(idx_j, (0, 2, 1))                         # (B, K, N)
    idx_i = jnp.transpose(idx_i, (0, 2, 1))

    # Gather source in bf16 (one-hot side is exact; f32 accumulation kept).
    x_src = x.astype(jnp.bfloat16)

    # Pad the node axis to a multiple of 128: lane-dense blocks, no masked
    # stores, no TN=N fallback.  Padded query columns are sliced off at the end.
    Np = ((N + 127) // 128) * 128
    pad = Np - N
    if pad:
        x_src = jnp.pad(x_src, ((0, 0), (0, 0), (0, pad)))
        idx_j = jnp.pad(idx_j, ((0, 0), (0, 0), (0, pad)))
        idx_i = jnp.pad(idx_i, ((0, 0), (0, 0), (0, pad)))

    TN = _pick_node_tile(Np, node_tile)
    n_tiles = Np // TN

    w = w.astype(jnp.float32)
    w_x, w_rel = w[:, :C], w[:, C:]                                 # (Cout, C) x2
    bias2d = bias.reshape(Cout, 1).astype(jnp.float32)

    # Gather source block: full padded node axis, changes only when b changes.
    src_index_map = lambda b, t: (b, 0, 0)
    src_spec = pl.BlockSpec((1, C, Np), src_index_map)
    if is_v7:
        # Single-buffer the batch-resident source on v7x (64 MiB VMEM); the
        # once-per-batch refetch bubble is negligible.
        try:
            src_spec = pl.BlockSpec((1, C, Np), src_index_map,
                                    pipeline_mode=pl.Buffered(1))
        except Exception:
            src_spec = pl.BlockSpec((1, C, Np), src_index_map)

    in_specs = [src_spec]
    args = [x_src]
    if not center_index:
        in_specs.append(pl.BlockSpec((1, K, TN), lambda b, t: (b, 0, t)))
        args.append(idx_i)
    in_specs.append(pl.BlockSpec((1, K, TN), lambda b, t: (b, 0, t)))
    args.append(idx_j)
    in_specs += [
        pl.BlockSpec((Cout, C), lambda b, t: (0, 0)),
        pl.BlockSpec((Cout, C), lambda b, t: (0, 0)),
        pl.BlockSpec((Cout, 1), lambda b, t: (0, 0)),
    ]
    args += [w_x, w_rel, bias2d]

    out = pl.pallas_call(
        _make_kernel(center_index, onehot_f32),
        out_shape=jax.ShapeDtypeStruct((B, Cout, Np), jnp.float32),
        grid_spec=pltpu.PrefetchScalarGridSpec(
            num_scalar_prefetch=0,
            grid=(B, n_tiles),
            in_specs=in_specs,
            out_specs=pl.BlockSpec((1, Cout, TN), lambda b, t: (b, 0, t)),
        ),
        compiler_params=pltpu.CompilerParams(
            dimension_semantics=("parallel", "parallel"),
            vmem_limit_bytes=_vmem_limit_bytes(is_v7),
        ),
    )(*args)

    return out[:, :, :N]                                            # (B, Cout, N)


def mrconv1d_reference(x, edge_index, w, bias):
    """Pure-JAX reference mirroring the PyTorch forward (f32 throughout)."""
    idx_j, idx_i = edge_index[0], edge_index[1]                     # (B, N, K)
    gather = jax.vmap(lambda xb, ib: xb[:, ib])                     # (C,N),(N,K)->(C,N,K)
    x_i = gather(x, idx_i)
    x_j = gather(x, idx_j)
    rel = jnp.max(x_j - x_i, axis=-1)                               # (B, C, N)
    feat = jnp.concatenate([x, rel], axis=1)                        # (B, 2C, N)
    out = jnp.einsum('oc,bcn->bon', w, feat) + bias[None, :, None]
    return jnp.maximum(out, 0.0)


if __name__ == "__main__":
    B, C, N, K, Cout = 2, 4, 16, 8, 8

    key = jax.random.PRNGKey(0)
    kx, ke0, ke1, kw, kb = jax.random.split(key, 5)

    x = jax.random.normal(kx, (B, C, N), dtype=jnp.float32)
    e0 = jax.random.randint(ke0, (B, N, K), 0, N, dtype=jnp.int32)
    e1 = jax.random.randint(ke1, (B, N, K), 0, N, dtype=jnp.int32)
    edge_index = jnp.stack([e0, e1], axis=0)                        # (2, B, N, K)

    # Conv1d(2C, Cout, kernel_size=1, bias=True) params in PyTorch (out, in) layout.
    fan_in = 2 * C
    w = jax.random.uniform(kw, (Cout, 2 * C), jnp.float32,
                           -1.0 / jnp.sqrt(fan_in), 1.0 / jnp.sqrt(fan_in))
    bias = jax.random.uniform(kb, (Cout,), jnp.float32,
                              -1.0 / jnp.sqrt(fan_in), 1.0 / jnp.sqrt(fan_in))

    # --- generic path (arbitrary center indices) ---
    out = jax.block_until_ready(mrconv1d(x, edge_index, w, bias))
    ref = mrconv1d_reference(x, edge_index, w, bias)
    assert out.shape == (B, Cout, N)
    # Tolerance accounts for the bf16 gather-source operand (one-hot side is
    # exact); f32 accumulation is kept throughout.
    assert jnp.allclose(out, ref, atol=5e-2, rtol=5e-2)

    # --- center-index fast path (ViG/DenseKnn: edge_index[1][b, n, k] == n) ---
    e1c = jnp.broadcast_to(jnp.arange(N, dtype=jnp.int32)[None, :, None],
                           (B, N, K))
    edge_index_c = jnp.stack([e0, e1c], axis=0)
    out_c = jax.block_until_ready(mrconv1d(x, edge_index_c, w, bias))
    ref_c = mrconv1d_reference(x, edge_index_c, w, bias)
    assert jnp.allclose(out_c, ref_c, atol=5e-2, rtol=5e-2)

    print("KERNEL_OK")
</pallas_src>

<mosaic_0001>
module attributes {stable_mosaic.version = 11 : i64} {
  func.func @kernel(%arg0: i32, %arg1: i32, %arg2: memref<1x4x128xbf16, #tpu.memory_space<vmem>>, %arg3: memref<1x8x128xi32, #tpu.memory_space<vmem>>, %arg4: memref<1x8x128xi32, #tpu.memory_space<vmem>>, %arg5: memref<8x4xf32, #tpu.memory_space<vmem>>, %arg6: memref<8x4xf32, #tpu.memory_space<vmem>>, %arg7: memref<8x1xf32, #tpu.memory_space<vmem>>, %arg8: memref<1x8x128xf32, #tpu.memory_space<vmem>>) attributes {dimension_semantics = [#tpu.dimension_semantics<parallel>, #tpu.dimension_semantics<parallel>], iteration_bounds = array<i64: 2, 1>, scalar_prefetch = 0 : i64, scratch_operands = 0 : i64, tpu.core_type = #tpu.core_type<tc>, window_params = [{transform_indices = @transform_0, window_bounds = array<i64: 1, 4, 128>}, {transform_indices = @transform_1, window_bounds = array<i64: 1, 8, 128>}, {transform_indices = @transform_2, window_bounds = array<i64: 1, 8, 128>}, {pipeline_mode = #tpu.pipeline_mode<synchronous>, transform_indices = @transform_3, window_bounds = array<i64: 8, 4>}, {pipeline_mode = #tpu.pipeline_mode<synchronous>, transform_indices = @transform_4, window_bounds = array<i64: 8, 4>}, {pipeline_mode = #tpu.pipeline_mode<synchronous>, transform_indices = @transform_5, window_bounds = array<i64: 8, 1>}, {transform_indices = @transform_6, window_bounds = array<i64: 1, 8, 128>}]} {
    %c0 = arith.constant 0 : index
    %c0_0 = arith.constant 0 : index
    %c0_1 = arith.constant 0 : index
    %0 = vector.load %arg3[%c0, %c0_0, %c0_1] : memref<1x8x128xi32, #tpu.memory_space<vmem>>, vector<1x8x128xi32>
    %1 = vector.shape_cast %0 : vector<1x8x128xi32> to vector<8x128xi32>
    %c0_2 = arith.constant 0 : index
    %c0_3 = arith.constant 0 : index
    %c0_4 = arith.constant 0 : index
    %2 = vector.load %arg2[%c0_2, %c0_3, %c0_4] : memref<1x4x128xbf16, #tpu.memory_space<vmem>>, vector<1x4x128xbf16>
    %3 = vector.shape_cast %2 : vector<1x4x128xbf16> to vector<4x128xbf16>
    %c0_5 = arith.constant 0 : index
    %c0_6 = arith.constant 0 : index
    %c0_7 = arith.constant 0 : index
    %4 = vector.load %arg4[%c0_5, %c0_6, %c0_7] : memref<1x8x128xi32, #tpu.memory_space<vmem>>, vector<1x8x128xi32>
    %5 = vector.shape_cast %4 : vector<1x8x128xi32> to vector<8x128xi32>
    %6 = tpu.iota {dimensions = array<i32: 0>} : vector<128x128xi32>
    %7 = vector.extract_strided_slice %5 {offsets = [0, 0], sizes = [1, 128], strides = [1, 1]} : vector<8x128xi32> to vector<1x128xi32>
    %8 = vector.broadcast %7 : vector<1x128xi32> to vector<128x128xi32>
    %9 = arith.cmpi eq, %6, %8 : vector<128x128xi32>
    %10 = vector.extract_strided_slice %1 {offsets = [0, 0], sizes = [1, 128], strides = [1, 1]} : vector<8x128xi32> to vector<1x128xi32>
    %11 = vector.broadcast %10 : vector<1x128xi32> to vector<128x128xi32>
    %12 = arith.cmpi eq, %6, %11 : vector<128x128xi32>
    %13 = arith.extui %9 : vector<128x128xi1> to vector<128x128xi32>
    %14 = arith.sitofp %13 : vector<128x128xi32> to vector<128x128xf32>
    %15 = arith.truncf %14 : vector<128x128xf32> to vector<128x128xbf16>
    %16 = arith.extui %12 : vector<128x128xi1> to vector<128x128xi32>
    %17 = arith.sitofp %16 : vector<128x128xi32> to vector<128x128xf32>
    %18 = arith.truncf %17 : vector<128x128xf32> to vector<128x128xbf16>
    %19 = arith.subf %15, %18 : vector<128x128xbf16>
    %cst = arith.constant dense<0.000000e+00> : vector<4x128xf32>
    %20 = tpu.matmul %3, %19, %cst {dimension_numbers = #tpu.dot_dimension_numbers<[1], [0], [0], [1], [0, 0, 1, 1], [], []>} : vector<4x128xbf16>, vector<128x128xbf16>, vector<4x128xf32> -> vector<4x128xf32>
    %21 = vector.extract_strided_slice %5 {offsets = [1, 0], sizes = [1, 128], strides = [1, 1]} : vector<8x128xi32> to vector<1x128xi32>
    %22 = vector.broadcast %21 : vector<1x128xi32> to vector<128x128xi32>
    %23 = arith.cmpi eq, %6, %22 : vector<128x128xi32>
    %24 = vector.extract_strided_slice %1 {offsets = [1, 0], sizes = [1, 128], strides = [1, 1]} : vector<8x128xi32> to vector<1x128xi32>
    %25 = vector.broadcast %24 : vector<1x128xi32> to vector<128x128xi32>
    %26 = arith.cmpi eq, %6, %25 : vector<128x128xi32>
    %27 = arith.extui %23 : vector<128x128xi1> to vector<128x128xi32>
    %28 = arith.sitofp %27 : vector<128x128xi32> to vector<128x128xf32>
    %29 = arith.truncf %28 : vector<128x128xf32> to vector<128x128xbf16>
    %30 = arith.extui %26 : vector<128x128xi1> to vector<128x128xi32>
    %31 = arith.sitofp %30 : vector<128x128xi32> to vector<128x128xf32>
    %32 = arith.truncf %31 : vector<128x128xf32> to vector<128x128xbf16>
    %33 = arith.subf %29, %32 : vector<128x128xbf16>
    %cst_8 = arith.constant dense<0.000000e+00> : vector<4x128xf32>
    %34 = tpu.matmul %3, %33, %cst_8 {dimension_numbers = #tpu.dot_dimension_numbers<[1], [0], [0], [1], [0, 0, 1, 1], [], []>} : vector<4x128xbf16>, vector<128x128xbf16>, vector<4x128xf32> -> vector<4x128xf32>
    %35 = arith.maximumf %20, %34 : vector<4x128xf32>
    %36 = vector.extract_strided_slice %5 {offsets = [2, 0], sizes = [1, 128], strides = [1, 1]} : vector<8x128xi32> to vector<1x128xi32>
    %37 = vector.broadcast %36 : vector<1x128xi32> to vector<128x128xi32>
    %38 = arith.cmpi eq, %6, %37 : vector<128x128xi32>
    %39 = vector.extract_strided_slice %1 {offsets = [2, 0], sizes = [1, 128], strides = [1, 1]} : vector<8x128xi32> to vector<1x128xi32>
    %40 = vector.broadcast %39 : vector<1x128xi32> to vector<128x128xi32>
    %41 = arith.cmpi eq, %6, %40 : vector<128x128xi32>
    %42 = arith.extui %38 : vector<128x128xi1> to vector<128x128xi32>
    %43 = arith.sitofp %42 : vector<128x128xi32> to vector<128x128xf32>
    %44 = arith.truncf %43 : vector<128x128xf32> to vector<128x128xbf16>
    %45 = arith.extui %41 : vector<128x128xi1> to vector<128x128xi32>
    %46 = arith.sitofp %45 : vector<128x128xi32> to vector<128x128xf32>
    %47 = arith.truncf %46 : vector<128x128xf32> to vector<128x128xbf16>
    %48 = arith.subf %44, %47 : vector<128x128xbf16>
    %cst_9 = arith.constant dense<0.000000e+00> : vector<4x128xf32>
    %49 = tpu.matmul %3, %48, %cst_9 {dimension_numbers = #tpu.dot_dimension_numbers<[1], [0], [0], [1], [0, 0, 1, 1], [], []>} : vector<4x128xbf16>, vector<128x128xbf16>, vector<4x128xf32> -> vector<4x128xf32>
    %50 = arith.maximumf %35, %49 : vector<4x128xf32>
    %51 = vector.extract_strided_slice %5 {offsets = [3, 0], sizes = [1, 128], strides = [1, 1]} : vector<8x128xi32> to vector<1x128xi32>
    %52 = vector.broadcast %51 : vector<1x128xi32> to vector<128x128xi32>
    %53 = arith.cmpi eq, %6, %52 : vector<128x128xi32>
    %54 = vector.extract_strided_slice %1 {offsets = [3, 0], sizes = [1, 128], strides = [1, 1]} : vector<8x128xi32> to vector<1x128xi32>
    %55 = vector.broadcast %54 : vector<1x128xi32> to vector<128x128xi32>
    %56 = arith.cmpi eq, %6, %55 : vector<128x128xi32>
    %57 = arith.extui %53 : vector<128x128xi1> to vector<128x128xi32>
    %58 = arith.sitofp %57 : vector<128x128xi32> to vector<128x128xf32>
    %59 = arith.truncf %58 : vector<128x128xf32> to vector<128x128xbf16>
    %60 = arith.extui %56 : vector<128x128xi1> to vector<128x128xi32>
    %61 = arith.sitofp %60 : vector<128x128xi32> to vector<128x128xf32>
    %62 = arith.truncf %61 : vector<128x128xf32> to vector<128x128xbf16>
    %63 = arith.subf %59, %62 : vector<128x128xbf16>
    %cst_10 = arith.constant dense<0.000000e+00> : vector<4x128xf32>
    %64 = tpu.matmul %3, %63, %cst_10 {dimension_numbers = #tpu.dot_dimension_numbers<[1], [0], [0], [1], [0, 0, 1, 1], [], []>} : vector<4x128xbf16>, vector<128x128xbf16>, vector<4x128xf32> -> vector<4x128xf32>
    %65 = arith.maximumf %50, %64 : vector<4x128xf32>
    %66 = vector.extract_strided_slice %5 {offsets = [4, 0], sizes = [1, 128], strides = [1, 1]} : vector<8x128xi32> to vector<1x128xi32>
    %67 = vector.broadcast %66 : vector<1x128xi32> to vector<128x128xi32>
    %68 = arith.cmpi eq, %6, %67 : vector<128x128xi32>
    %69 = vector.extract_strided_slice %1 {offsets = [4, 0], sizes = [1, 128], strides = [1, 1]} : vector<8x128xi32> to vector<1x128xi32>
    %70 = vector.broadcast %69 : vector<1x128xi32> to vector<128x128xi32>
    %71 = arith.cmpi eq, %6, %70 : vector<128x128xi32>
    %72 = arith.extui %68 : vector<128x128xi1> to vector<128x128xi32>
    %73 = arith.sitofp %72 : vector<128x128xi32> to vector<128x128xf32>
    %74 = arith.truncf %73 : vector<128x128xf32> to vector<128x128xbf16>
    %75 = arith.extui %71 : vector<128x128xi1> to vector<128x128xi32>
    %76 = arith.sitofp %75 : vector<128x128xi32> to vector<128x128xf32>
    %77 = arith.truncf %76 : vector<128x128xf32> to vector<128x128xbf16>
    %78 = arith.subf %74, %77 : vector<128x128xbf16>
    %cst_11 = arith.constant dense<0.000000e+00> : vector<4x128xf32>
    %79 = tpu.matmul %3, %78, %cst_11 {dimension_numbers = #tpu.dot_dimension_numbers<[1], [0], [0], [1], [0, 0, 1, 1], [], []>} : vector<4x128xbf16>, vector<128x128xbf16>, vector<4x128xf32> -> vector<4x128xf32>
    %80 = arith.maximumf %65, %79 : vector<4x128xf32>
    %81 = vector.extract_strided_slice %5 {offsets = [5, 0], sizes = [1, 128], strides = [1, 1]} : vector<8x128xi32> to vector<1x128xi32>
    %82 = vector.broadcast %81 : vector<1x128xi32> to vector<128x128xi32>
    %83 = arith.cmpi eq, %6, %82 : vector<128x128xi32>
    %84 = vector.extract_strided_slice %1 {offsets = [5, 0], sizes = [1, 128], strides = [1, 1]} : vector<8x128xi32> to vector<1x128xi32>
    %85 = vector.broadcast %84 : vector<1x128xi32> to vector<128x128xi32>
    %86 = arith.cmpi eq, %6, %85 : vector<128x128xi32>
    %87 = arith.extui %83 : vector<128x128xi1> to vector<128x128xi32>
    %88 = arith.sitofp %87 : vector<128x128xi32> to vector<128x128xf32>
    %89 = arith.truncf %88 : vector<128x128xf32> to vector<128x128xbf16>
    %90 = arith.extui %86 : vector<128x128xi1> to vector<128x128xi32>
    %91 = arith.sitofp %90 : vector<128x128xi32> to vector<128x128xf32>
    %92 = arith.truncf %91 : vector<128x128xf32> to vector<128x128xbf16>
    %93 = arith.subf %89, %92 : vector<128x128xbf16>
    %cst_12 = arith.constant dense<0.000000e+00> : vector<4x128xf32>
    %94 = tpu.matmul %3, %93, %cst_12 {dimension_numbers = #tpu.dot_dimension_numbers<[1], [0], [0], [1], [0, 0, 1, 1], [], []>} : vector<4x128xbf16>, vector<128x128xbf16>, vector<4x128xf32> -> vector<4x128xf32>
    %95 = arith.maximumf %80, %94 : vector<4x128xf32>
    %96 = vector.extract_strided_slice %5 {offsets = [6, 0], sizes = [1, 128], strides = [1, 1]} : vector<8x128xi32> to vector<1x128xi32>
    %97 = vector.broadcast %96 : vector<1x128xi32> to vector<128x128xi32>
    %98 = arith.cmpi eq, %6, %97 : vector<128x128xi32>
    %99 = vector.extract_strided_slice %1 {offsets = [6, 0], sizes = [1, 128], strides = [1, 1]} : vector<8x128xi32> to vector<1x128xi32>
    %100 = vector.broadcast %99 : vector<1x128xi32> to vector<128x128xi32>
    %101 = arith.cmpi eq, %6, %100 : vector<128x128xi32>
    %102 = arith.extui %98 : vector<128x128xi1> to vector<128x128xi32>
    %103 = arith.sitofp %102 : vector<128x128xi32> to vector<128x128xf32>
    %104 = arith.truncf %103 : vector<128x128xf32> to vector<128x128xbf16>
    %105 = arith.extui %101 : vector<128x128xi1> to vector<128x128xi32>
    %106 = arith.sitofp %105 : vector<128x128xi32> to vector<128x128xf32>
    %107 = arith.truncf %106 : vector<128x128xf32> to vector<128x128xbf16>
    %108 = arith.subf %104, %107 : vector<128x128xbf16>
    %cst_13 = arith.constant dense<0.000000e+00> : vector<4x128xf32>
    %109 = tpu.matmul %3, %108, %cst_13 {dimension_numbers = #tpu.dot_dimension_numbers<[1], [0], [0], [1], [0, 0, 1, 1], [], []>} : vector<4x128xbf16>, vector<128x128xbf16>, vector<4x128xf32> -> vector<4x128xf32>
    %110 = arith.maximumf %95, %109 : vector<4x128xf32>
    %111 = vector.extract_strided_slice %5 {offsets = [7, 0], sizes = [1, 128], strides = [1, 1]} : vector<8x128xi32> to vector<1x128xi32>
    %112 = vector.broadcast %111 : vector<1x128xi32> to vector<128x128xi32>
    %113 = arith.cmpi eq, %6, %112 : vector<128x128xi32>
    %114 = vector.extract_strided_slice %1 {offsets = [7, 0], sizes = [1, 128], strides = [1, 1]} : vector<8x128xi32> to vector<1x128xi32>
    %115 = vector.broadcast %114 : vector<1x128xi32> to vector<128x128xi32>
    %116 = arith.cmpi eq, %6, %115 : vector<128x128xi32>
    %117 = arith.extui %113 : vector<128x128xi1> to vector<128x128xi32>
    %118 = arith.sitofp %117 : vector<128x128xi32> to vector<128x128xf32>
    %119 = arith.truncf %118 : vector<128x128xf32> to vector<128x128xbf16>
    %120 = arith.extui %116 : vector<128x128xi1> to vector<128x128xi32>
    %121 = arith.sitofp %120 : vector<128x128xi32> to vector<128x128xf32>
    %122 = arith.truncf %121 : vector<128x128xf32> to vector<128x128xbf16>
    %123 = arith.subf %119, %122 : vector<128x128xbf16>
    %cst_14 = arith.constant dense<0.000000e+00> : vector<4x128xf32>
    %124 = tpu.matmul %3, %123, %cst_14 {dimension_numbers = #tpu.dot_dimension_numbers<[1], [0], [0], [1], [0, 0, 1, 1], [], []>} : vector<4x128xbf16>, vector<128x128xbf16>, vector<4x128xf32> -> vector<4x128xf32>
    %125 = arith.maximumf %110, %124 : vector<4x128xf32>
    %126 = arith.extf %3 : vector<4x128xbf16> to vector<4x128xf32>
    %c0_15 = arith.constant 0 : index
    %c0_16 = arith.constant 0 : index
    %127 = vector.load %arg5[%c0_15, %c0_16] : memref<8x4xf32, #tpu.memory_space<vmem>>, vector<8x4xf32>
    %cst_17 = arith.constant dense<0.000000e+00> : vector<8x128xf32>
    %128 = tpu.matmul %127, %126, %cst_17 {dimension_numbers = #tpu.dot_dimension_numbers<[1], [0], [0], [1], [0, 0, 1, 1], [], []>} : vector<8x4xf32>, vector<4x128xf32>, vector<8x128xf32> -> vector<8x128xf32>
    %c0_18 = arith.constant 0 : index
    %c0_19 = arith.constant 0 : index
    %129 = vector.load %arg6[%c0_18, %c0_19] : memref<8x4xf32, #tpu.memory_space<vmem>>, vector<8x4xf32>
    %cst_20 = arith.constant dense<0.000000e+00> : vector<8x128xf32>
    %130 = tpu.matmul %129, %125, %cst_20 {dimension_numbers = #tpu.dot_dimension_numbers<[1], [0], [0], [1], [0, 0, 1, 1], [], []>} : vector<8x4xf32>, vector<4x128xf32>, vector<8x128xf32> -> vector<8x128xf32>
    %131 = arith.addf %128, %130 : vector<8x128xf32>
    %c0_21 = arith.constant 0 : index
    %c0_22 = arith.constant 0 : index
    %132 = vector.load %arg7[%c0_21, %c0_22] : memref<8x1xf32, #tpu.memory_space<vmem>>, vector<8x1xf32>
    %133 = vector.broadcast %132 : vector<8x1xf32> to vector<8x128xf32>
    %134 = arith.addf %131, %133 : vector<8x128xf32>
    %cst_23 = arith.constant 0.000000e+00 : f32
    %135 = vector.broadcast %cst_23 : f32 to vector<8x128xf32>
    %136 = arith.maximumf %134, %135 : vector<8x128xf32>
    %c0_24 = arith.constant 0 : index
    %c0_25 = arith.constant 0 : index
    %c0_26 = arith.constant 0 : index
    %137 = vector.load %arg8[%c0_24, %c0_25, %c0_26] : memref<1x8x128xf32, #tpu.memory_space<vmem>>, vector<1x8x128xf32>
    %138 = vector.shape_cast %137 : vector<1x8x128xf32> to vector<8x128xf32>
    %139 = vector.shape_cast %136 : vector<8x128xf32> to vector<1x8x128xf32>
    tpu.vector_store %arg8[%c0_24, %c0_25, %c0_26], %139 {strides = array<i32>} : memref<1x8x128xf32, #tpu.memory_space<vmem>>, vector<1x8x128xf32>,
    return
  }
  func.func @transform_0(%arg0: i32, %arg1: i32) -> (i32, i32, i32) {
    %c0_i32 = arith.constant 0 : i32
    %c0_i32_0 = arith.constant 0 : i32
    %c0_i32_1 = arith.constant 0 : i32
    return %arg0, %c0_i32, %c0_i32_0 : i32, i32, i32
  }
  func.func @transform_1(%arg0: i32, %arg1: i32) -> (i32, i32, i32) {
    %c0_i32 = arith.constant 0 : i32
    %c0_i32_0 = arith.constant 0 : i32
    return %arg0, %c0_i32, %arg1 : i32, i32, i32
  }
  func.func @transform_2(%arg0: i32, %arg1: i32) -> (i32, i32, i32) {
    %c0_i32 = arith.constant 0 : i32
    %c0_i32_0 = arith.constant 0 : i32
    return %arg0, %c0_i32, %arg1 : i32, i32, i32
  }
  func.func @transform_3(%arg0: i32, %arg1: i32) -> (i32, i32) {
    %c0_i32 = arith.constant 0 : i32
    %c0_i32_0 = arith.constant 0 : i32
    %c0_i32_1 = arith.constant 0 : i32
    return %c0_i32, %c0_i32_0 : i32, i32
  }
  func.func @transform_4(%arg0: i32, %arg1: i32) -> (i32, i32) {
    %c0_i32 = arith.constant 0 : i32
    %c0_i32_0 = arith.constant 0 : i32
    %c0_i32_1 = arith.constant 0 : i32
    return %c0_i32, %c0_i32_0 : i32, i32
  }
  func.func @transform_5(%arg0: i32, %arg1: i32) -> (i32, i32) {
    %c0_i32 = arith.constant 0 : i32
    %c0_i32_0 = arith.constant 0 : i32
    %c0_i32_1 = arith.constant 0 : i32
    return %c0_i32, %c0_i32_0 : i32, i32
  }
  func.func @transform_6(%arg0: i32, %arg1: i32) -> (i32, i32, i32) {
    %c0_i32 = arith.constant 0 : i32
    %c0_i32_0 = arith.constant 0 : i32
    return %arg0, %c0_i32, %arg1 : i32, i32, i32
  }
}

</mosaic_0001>

<llo_original>
// kernel: tpu_custom_call.1
$region0: #{tpu_custom_call.1}
  #allocation0 [shape = 'u32[]', space=smem, size = 0x4, offset = 0x4, fixed_abs, tag = 'smem constant byte address 0x4 - core index']
  #allocation1 [shape = 'u32[144,128]{1,0:T(1,128)}', space=vmem, size = 0x12000, scoped, tag = 'internal scratch']
  %s0 = inlined_call_operand.hbm [shape: bf16[2,4,128], index: 0, kind: input, shape index: {}]
  %s1 = inlined_call_operand.hbm [shape: s32[2,8,128], index: 1, kind: input, shape index: {}]
  %s2 = inlined_call_operand.hbm [shape: s32[2,8,128], index: 2, kind: input, shape index: {}]
  %s3 = inlined_call_operand.hbm [shape: f32[8,4], index: 3, kind: input, shape index: {}]
  %s4 = inlined_call_operand.hbm [shape: f32[8,4], index: 4, kind: input, shape index: {}]
  %s5 = inlined_call_operand.hbm [shape: f32[8,1], index: 5, kind: input, shape index: {}]
  %s6 = inlined_call_operand.hbm [shape: f32[2,8,128], index: 6, kind: output, shape index: {}]
  %s7 = sld [smem:[#allocation0]]
  $region81: #{tpu_custom_call.1} parent=0
    _
  %s9 = ssub.s32 1, %s7
  %s10 = scalar_select 0, %s9, %s7
  $region1: #{tpu_custom_call.1} parent=0
    #allocation2 [shape = 'u8[2048]{0}', space=vmem, size = 0x800, scoped, tag = 'input window, operand 0']
    #allocation3 [shape = 's32[2]{0}', space=sflag, size = 0x8, scoped, tag = 'scoped memory for tpu_custom_call.1']
    #allocation4 [shape = 's32[2]{0}', space=sflag, size = 0x8, scoped, tag = 'scoped memory for tpu_custom_call.1']
    #allocation5 [shape = 'u8[8192]{0}', space=vmem, size = 0x2000, scoped, tag = 'input window, operand 1']
    #allocation6 [shape = 's32[2]{0}', space=sflag, size = 0x8, scoped, tag = 'scoped memory for tpu_custom_call.1']
    #allocation7 [shape = 'u8[8192]{0}', space=vmem, size = 0x2000, scoped, tag = 'input window, operand 2']
    #allocation8 [shape = 'u8[4096]{0}', space=vmem, size = 0x1000, scoped, tag = 'input window, operand 3, single buffered']
    #allocation9 [shape = 's32[1]{0}', space=sflag, size = 0x4, scoped, tag = 'scoped memory for tpu_custom_call.1']
    #allocation10 [shape = 'u8[4096]{0}', space=vmem, size = 0x1000, scoped, tag = 'input window, operand 4, single buffered']
    #allocation11 [shape = 'u8[4096]{0}', space=vmem, size = 0x1000, scoped, tag = 'input window, operand 5, single buffered']
    #allocation12 [shape = 's32[1]{0}', space=sflag, size = 0x4, scoped, tag = 'scoped memory for tpu_custom_call.1']
    #allocation13 [shape = 'u8[8192]{0}', space=vmem, size = 0x2000, scoped, tag = 'output window, operand 0']
    %11 = vsyncpa [#allocation3], 0
    %s12 = scalar_lea.sflag [#allocation3], 1
    %13 = vsyncpa %s12, 0
    %14 = vsyncpa [#allocation6], 0
    %s15 = scalar_lea.sflag [#allocation6], 1
    %16 = vsyncpa %s15, 0
    %17 = vsyncpa [#allocation9], 0
    %18 = vsyncpa [#allocation12], 0
    %19 = vsyncpa [#allocation4], 0
    %s20 = scalar_lea.sflag [#allocation4], 1
    %21 = vsyncpa %s20, 0
    loop: start=0, step=1, limit=4
    $region2: #{tpu_custom_call.1} parent=1 // loop_pre_header
      _
    $region3: #{tpu_custom_call.1} parent=1 // loop_header
      %s23 = sphi 0, %s27
      %p24 = scmp.ge.s32.totalorder %s23, 4
      %s30 = sphi 0, %s42
      %s31 = sphi 0, %s38
      %s32 = sphi 0, %s30
      %s33 = sphi 0, %s31
      %s34 = sphi 0, %s32
      %s35 = sphi 0, %s33
      %s45 = sphi 0, %s47
      %s48 = sphi 0, %s45
      %s49 = sphi 0, %s48
      %s65 = sphi 0, %s49
      %s73 = sphi 0, %s75
      %s76 = sphi 0, %s73
      %s77 = sphi 0, %s76
      %s93 = sphi 0, %s77
      %s101 = sphi 0, %s103
      %s104 = sphi 0, %s101
      %s105 = sphi 0, %s104
      %s121 = sphi 0, %s105
      %s125 = sphi 0, %s125
      %s127 = sphi 0, %s125
      %s128 = sphi 0, %s127
      %s142 = sphi 0, %s128
      %s146 = sphi 0, %s146
      %s148 = sphi 0, %s146
      %s149 = sphi 0, %s148
      %s163 = sphi 0, %s149
      %s167 = sphi 0, %s167
      %s169 = sphi 0, %s167
      %s170 = sphi 0, %s169
      %s184 = sphi 0, %s170
      %s192 = sphi 0, %s194
      %s195 = sphi 0, %s192
      %s196 = sphi 0, %s195
      %s212 = sphi 0, %s196
    $region4: #{tpu_custom_call.1} parent=1 // loop_header_branch
      %26 = sbr.rel (%p24) target = $region8
    $region5: #{tpu_custom_call.1} parent=1 // loop_body
      %s28 = ssub.s32 %s23, 1
      %s29 = ssub.s32 %s23, 2
      %s36 = sadd.s32 1, %s31
      %p37 = scmp.ge.s32.totalorder %s36, 1
      %s38 = scalar_select %p37, 0, %s36
      %s39 = sadd.s32 1, %s30
      %s40 = scalar_select %p37, %s39, %s30
      %p41 = scmp.ge.s32.totalorder %s40, 2
      %s42 = scalar_select %p41, 0, %s40
      %s43 = ssub.s32 %s30, %s42
      %p44 = scmp.eq.s32.totalorder %s43, 0
      %s46 = sadd.s32 %s45, 1
      %s47 = scalar_select %p44, %s45, %s46
      %p50 = pneg %p44
      %p51 = scmp.eq.s32.totalorder %s23, 1
      %p52 = por %p50, %p51
      %p53 = scmp.ne.s32.totalorder %s45, %s48
      %p54 = scmp.eq.s32.totalorder %s23, 0
      %p55 = por %p53, %p54
      %p56 = scmp.ne.s32.totalorder %s45, %s48
      %p57 = scmp.eq.s32.totalorder %s28, 1
      %p58 = por %p56, %p57
      %p59 = scmp.ne.s32.totalorder %s48, %s49
      %p60 = scmp.eq.s32.totalorder %s28, 0
      %p61 = por %p59, %p60
      %p62 = scmp.ne.s32.totalorder %s48, %s49
      %p63 = scmp.eq.s32.totalorder %s29, 1
      %p64 = por %p62, %p63
      %p66 = scmp.ne.s32.totalorder %s49, %s65
      %p67 = scmp.eq.s32.totalorder %s29, 0
      %p68 = por %p66, %p67
      %s69 = ssub.s32 %s30, %s42
      %s70 = ssub.s32 %s31, %s38
      %s71 = sor.u32 %s69, %s70
      %p72 = scmp.eq.s32.totalorder %s71, 0
      %s74 = sadd.s32 %s73, 1
      %s75 = scalar_select %p72, %s73, %s74
      %p78 = pneg %p72
      %p79 = scmp.eq.s32.totalorder %s23, 1
      %p80 = por %p78, %p79
      %p81 = scmp.ne.s32.totalorder %s73, %s76
      %p82 = scmp.eq.s32.totalorder %s23, 0
      %p83 = por %p81, %p82
      %p84 = scmp.ne.s32.totalorder %s73, %s76
      %p85 = scmp.eq.s32.totalorder %s28, 1
      %p86 = por %p84, %p85
      %p87 = scmp.ne.s32.totalorder %s76, %s77
      %p88 = scmp.eq.s32.totalorder %s28, 0
      %p89 = por %p87, %p88
      %p90 = scmp.ne.s32.totalorder %s76, %s77
      %p91 = scmp.eq.s32.totalorder %s29, 1
      %p92 = por %p90, %p91
      %p94 = scmp.ne.s32.totalorder %s77, %s93
      %p95 = scmp.eq.s32.totalorder %s29, 0
      %p96 = por %p94, %p95
      %s97 = ssub.s32 %s30, %s42
      %s98 = ssub.s32 %s31, %s38
      %s99 = sor.u32 %s97, %s98
      %p100 = scmp.eq.s32.totalorder %s99, 0
      %s102 = sadd.s32 %s101, 1
      %s103 = scalar_select %p100, %s101, %s102
      %p106 = pneg %p100
      %p107 = scmp.eq.s32.totalorder %s23, 1
      %p108 = por %p106, %p107
      %p109 = scmp.ne.s32.totalorder %s101, %s104
      %p110 = scmp.eq.s32.totalorder %s23, 0
      %p111 = por %p109, %p110
      %p112 = scmp.ne.s32.totalorder %s101, %s104
      %p113 = scmp.eq.s32.totalorder %s28, 1
      %p114 = por %p112, %p113
      %p115 = scmp.ne.s32.totalorder %s104, %s105
      %p116 = scmp.eq.s32.totalorder %s28, 0
      %p117 = por %p115, %p116
      %p118 = scmp.ne.s32.totalorder %s104, %s105
      %p119 = scmp.eq.s32.totalorder %s29, 1
      %p120 = por %p118, %p119
      %p122 = scmp.ne.s32.totalorder %s105, %s121
      %p123 = scmp.eq.s32.totalorder %s29, 0
      %p124 = por %p122, %p123
      %s126 = sadd.s32 %s125, 1
      %p129 = scmp.eq.s32.totalorder %s23, 1
      %p130 = scmp.ne.s32.totalorder %s125, %s127
      %p131 = scmp.eq.s32.totalorder %s23, 0
      %p132 = por %p130, %p131
      %p133 = scmp.ne.s32.totalorder %s125, %s127
      %p134 = scmp.eq.s32.totalorder %s28, 1
      %p135 = por %p133, %p134
      %p136 = scmp.ne.s32.totalorder %s127, %s128
      %p137 = scmp.eq.s32.totalorder %s28, 0
      %p138 = por %p136, %p137
      %p139 = scmp.ne.s32.totalorder %s127, %s128
      %p140 = scmp.eq.s32.totalorder %s29, 1
      %p141 = por %p139, %p140
      %p143 = scmp.ne.s32.totalorder %s128, %s142
      %p144 = scmp.eq.s32.totalorder %s29, 0
      %p145 = por %p143, %p144
      %s147 = sadd.s32 %s146, 1
      %p150 = scmp.eq.s32.totalorder %s23, 1
      %p151 = scmp.ne.s32.totalorder %s146, %s148
      %p152 = scmp.eq.s32.totalorder %s23, 0
      %p153 = por %p151, %p152
      %p154 = scmp.ne.s32.totalorder %s146, %s148
      %p155 = scmp.eq.s32.totalorder %s28, 1
      %p156 = por %p154, %p155
      %p157 = scmp.ne.s32.totalorder %s148, %s149
      %p158 = scmp.eq.s32.totalorder %s28, 0
      %p159 = por %p157, %p158
      %p160 = scmp.ne.s32.totalorder %s148, %s149
      %p161 = scmp.eq.s32.totalorder %s29, 1
      %p162 = por %p160, %p161
      %p164 = scmp.ne.s32.totalorder %s149, %s163
      %p165 = scmp.eq.s32.totalorder %s29, 0
      %p166 = por %p164, %p165
      %s168 = sadd.s32 %s167, 1
      %p171 = scmp.eq.s32.totalorder %s23, 1
      %p172 = scmp.ne.s32.totalorder %s167, %s169
      %p173 = scmp.eq.s32.totalorder %s23, 0
      %p174 = por %p172, %p173
      %p175 = scmp.ne.s32.totalorder %s167, %s169
      %p176 = scmp.eq.s32.totalorder %s28, 1
      %p177 = por %p175, %p176
      %p178 = scmp.ne.s32.totalorder %s169, %s170
      %p179 = scmp.eq.s32.totalorder %s28, 0
      %p180 = por %p178, %p179
      %p181 = scmp.ne.s32.totalorder %s169, %s170
      %p182 = scmp.eq.s32.totalorder %s29, 1
      %p183 = por %p181, %p182
      %p185 = scmp.ne.s32.totalorder %s170, %s184
      %p186 = scmp.eq.s32.totalorder %s29, 0
      %p187 = por %p185, %p186
      %s188 = ssub.s32 %s30, %s42
      %s189 = ssub.s32 %s31, %s38
      %s190 = sor.u32 %s188, %s189
      %p191 = scmp.eq.s32.totalorder %s190, 0
      %s193 = sadd.s32 %s192, 1
      %s194 = scalar_select %p191, %s192, %s193
      %p197 = pneg %p191
      %p198 = scmp.eq.s32.totalorder %s23, 1
      %p199 = por %p197, %p198
      %p200 = scmp.ne.s32.totalorder %s192, %s195
      %p201 = scmp.eq.s32.totalorder %s23, 0
      %p202 = por %p200, %p201
      %p203 = scmp.ne.s32.totalorder %s192, %s195
      %p204 = scmp.eq.s32.totalorder %s28, 1
      %p205 = por %p203, %p204
      %p206 = scmp.ne.s32.totalorder %s195, %s196
      %p207 = scmp.eq.s32.totalorder %s28, 0
      %p208 = por %p206, %p207
      %p209 = scmp.ne.s32.totalorder %s195, %s196
      %p210 = scmp.eq.s32.totalorder %s29, 1
      %p211 = por %p209, %p210
      %p213 = scmp.ne.s32.totalorder %s196, %s212
      %p214 = scmp.eq.s32.totalorder %s29, 0
      %p215 = por %p213, %p214
      %p216 = scmp.le.s32.totalorder 1, %s23
      %p217 = scmp.lt.s32.totalorder %s23, 3
      %p218 = pnand %p216, %p217
      %p219 = pneg %p218
      // Predicated region
      $region9: #{tpu_custom_call.1} parent=5 // pred_check
        _
      $region10: #{tpu_custom_call.1} parent=5 // pred_check_branch
        %221 = sbr.rel (%p218) target = $region12
      $region11: #{tpu_custom_call.1} parent=5 // pred_region
        %s222 = ssub.s32 %s23, 1
        // Predicated region
        $region13: #{tpu_custom_call.1} parent=11 // pred_check
          %p223 = pneg %p138
        $region14: #{tpu_custom_call.1} parent=11 // pred_check_branch
          %225 = sbr.rel (%p223) target = $region16
        $region15: #{tpu_custom_call.1} parent=11 // pred_region
          %s227 = ssub.s32 128, 128
          %228 = vsyncadd [#allocation9], %s227
          %s230 = sshll.u32 [#allocation8], 4
          %s231 = int_to_ptr.vmem [resolvable:$true] %s230
          %233 = dma.hbm_to_vmem [thread:$0]  %s3, 128, %s231, [#allocation9]
        $region16: #{tpu_custom_call.1} parent=11 // pred_fallthru
          _
        // Predicated region
        $region17: #{tpu_custom_call.1} parent=11 // pred_check
          %p234 = pneg %p159
        $region18: #{tpu_custom_call.1} parent=11 // pred_check_branch
          %236 = sbr.rel (%p234) target = $region20
        $region19: #{tpu_custom_call.1} parent=11 // pred_region
          %s238 = ssub.s32 128, 128
          %239 = vsyncadd [#allocation9], %s238
          %s241 = sshll.u32 [#allocation10], 4
          %s242 = int_to_ptr.vmem [resolvable:$true] %s241
          %244 = dma.hbm_to_vmem [thread:$0]  %s4, 128, %s242, [#allocation9]
        $region20: #{tpu_custom_call.1} parent=11 // pred_fallthru
          _
        // Predicated region
        $region21: #{tpu_custom_call.1} parent=11 // pred_check
          %p245 = pneg %p180
        $region22: #{tpu_custom_call.1} parent=11 // pred_check_branch
          %247 = sbr.rel (%p245) target = $region24
        $region23: #{tpu_custom_call.1} parent=11 // pred_region
          %s249 = ssub.s32 128, 128
          %250 = vsyncadd [#allocation12], %s249
          %s252 = sshll.u32 [#allocation11], 4
          %s253 = int_to_ptr.vmem [resolvable:$true] %s252
          %255 = dma.hbm_to_vmem [thread:$0]  %s5, 128, %s253, [#allocation12]
        $region24: #{tpu_custom_call.1} parent=11 // pred_fallthru
          _
      $region12: #{tpu_custom_call.1} parent=5 // pred_fallthru
        _
      %p256 = scmp.lt.s32.totalorder %s23, 2
      // Predicated region
      $region25: #{tpu_custom_call.1} parent=5 // pred_check
        %p257 = pneg %p256
      $region26: #{tpu_custom_call.1} parent=5 // pred_check_branch
        %259 = sbr.rel (%p257) target = $region28
      $region27: #{tpu_custom_call.1} parent=5 // pred_region
        // Predicated region
        $region29: #{tpu_custom_call.1} parent=27 // pred_check
          %p260 = pneg %p55
        $region30: #{tpu_custom_call.1} parent=27 // pred_check_branch
          %262 = sbr.rel (%p260) target = $region32
        $region31: #{tpu_custom_call.1} parent=27 // pred_region
          %s263 = sand.u32 %s45, 1
          %s264 = scalar_lea.sflag [#allocation3], %s263
          %s265 = sand.u32 %s45, 1
          %s266 = smul.addr %s265, 2
          %s267 = scalar_lea.vmem [#allocation2], %s266
          %s269 = ssub.s32 32, 32
          %270 = vsyncadd %s264, %s269
          %s271 = smul.addr %s30, 32
          %s272 = scalar_lea.hbm %s0, %s271
          %s274 = sshll.u32 %s267, 4
          %s275 = int_to_ptr.vmem [resolvable:$true] %s274
          %277 = dma.hbm_to_vmem [thread:$0]  %s272, 32, %s275, %s264
        $region32: #{tpu_custom_call.1} parent=27 // pred_fallthru
          _
        // Predicated region
        $region33: #{tpu_custom_call.1} parent=27 // pred_check
          %p278 = pneg %p83
        $region34: #{tpu_custom_call.1} parent=27 // pred_check_branch
          %280 = sbr.rel (%p278) target = $region36
        $region35: #{tpu_custom_call.1} parent=27 // pred_region
          %s281 = sand.u32 %s23, 1
          %s282 = scalar_lea.sflag [#allocation6], %s281
          %s283 = sand.u32 %s73, 1
          %s284 = smul.addr %s283, 8
          %s285 = scalar_lea.vmem [#allocation5], %s284
          %s287 = ssub.s32 128, 128
          %288 = vsyncadd %s282, %s287
          %s289 = sadd.s32 %s31, %s30
          %s290 = smul.addr %s289, 128
          %s291 = scalar_lea.hbm %s1, %s290
          %s293 = sshll.u32 %s285, 4
          %s294 = int_to_ptr.vmem [resolvable:$true] %s293
          %296 = dma.hbm_to_vmem [thread:$0]  %s291, 128, %s294, %s282
        $region36: #{tpu_custom_call.1} parent=27 // pred_fallthru
          _
        // Predicated region
        $region37: #{tpu_custom_call.1} parent=27 // pred_check
          %p297 = pneg %p111
        $region38: #{tpu_custom_call.1} parent=27 // pred_check_branch
          %299 = sbr.rel (%p297) target = $region40
        $region39: #{tpu_custom_call.1} parent=27 // pred_region
          %s300 = sand.u32 %s23, 1
          %s301 = scalar_lea.sflag [#allocation6], %s300
          %s302 = sand.u32 %s101, 1
          %s303 = smul.addr %s302, 8
          %s304 = scalar_lea.vmem [#allocation7], %s303
          %s306 = ssub.s32 128, 128
          %307 = vsyncadd %s301, %s306
          %s308 = sadd.s32 %s31, %s30
          %s309 = smul.addr %s308, 128
          %s310 = scalar_lea.hbm %s2, %s309
          %s312 = sshll.u32 %s304, 4
          %s313 = int_to_ptr.vmem [resolvable:$true] %s312
          %315 = dma.hbm_to_vmem [thread:$0]  %s310, 128, %s313, %s301
        $region40: #{tpu_custom_call.1} parent=27 // pred_fallthru
          _
      $region28: #{tpu_custom_call.1} parent=5 // pred_fallthru
        _
      %p316 = scmp.le.s32.totalorder 1, %s23
      %p317 = scmp.lt.s32.totalorder %s23, 3
      %p318 = pnand %p316, %p317
      %p319 = pneg %p318
      // Predicated region
      $region41: #{tpu_custom_call.1} parent=5 // pred_check
        _
      $region42: #{tpu_custom_call.1} parent=5 // pred_check_branch
        %321 = sbr.rel (%p318) target = $region44
      $region43: #{tpu_custom_call.1} parent=5 // pred_region
        %s322 = ssub.s32 %s23, 1
        %s323 = sand.u32 %s48, 1
        %s324 = scalar_lea.sflag [#allocation3], %s323
        %s325 = sand.u32 %s48, 1
        %s326 = smul.addr %s325, 2
        %s327 = scalar_lea.vmem [#allocation2], %s326
        // Predicated region
        $region45: #{tpu_custom_call.1} parent=43 // pred_check
          %p328 = pneg %p61
        $region46: #{tpu_custom_call.1} parent=43 // pred_check_branch
          %330 = sbr.rel (%p328) target = $region48
        $region47: #{tpu_custom_call.1} parent=43 // pred_region
          %331 = dma.done %s324, 32
        $region48: #{tpu_custom_call.1} parent=43 // pred_fallthru
          _
        %s332 = sand.u32 %s28, 1
        %s333 = scalar_lea.sflag [#allocation6], %s332
        %s334 = sand.u32 %s76, 1
        %s335 = smul.addr %s334, 8
        %s336 = scalar_lea.vmem [#allocation5], %s335
        // Predicated region
        $region49: #{tpu_custom_call.1} parent=43 // pred_check
          %p337 = pneg %p89
        $region50: #{tpu_custom_call.1} parent=43 // pred_check_branch
          %339 = sbr.rel (%p337) target = $region52
        $region51: #{tpu_custom_call.1} parent=43 // pred_region
          %340 = dma.done %s333, 128
        $region52: #{tpu_custom_call.1} parent=43 // pred_fallthru
          _
        %s341 = sand.u32 %s28, 1
        %s342 = scalar_lea.sflag [#allocation6], %s341
        %s343 = sand.u32 %s104, 1
        %s344 = smul.addr %s343, 8
        %s345 = scalar_lea.vmem [#allocation7], %s344
        // Predicated region
        $region53: #{tpu_custom_call.1} parent=43 // pred_check
          %p346 = pneg %p117
        $region54: #{tpu_custom_call.1} parent=43 // pred_check_branch
          %348 = sbr.rel (%p346) target = $region56
        $region55: #{tpu_custom_call.1} parent=43 // pred_region
          %349 = dma.done %s342, 128
        $region56: #{tpu_custom_call.1} parent=43 // pred_fallthru
          _
        // Predicated region
        $region57: #{tpu_custom_call.1} parent=43 // pred_check
          %p350 = pneg %p138
        $region58: #{tpu_custom_call.1} parent=43 // pred_check_branch
          %352 = sbr.rel (%p350) target = $region60
        $region59: #{tpu_custom_call.1} parent=43 // pred_region
          %353 = dma.done [#allocation9], 128
        $region60: #{tpu_custom_call.1} parent=43 // pred_fallthru
          _
        // Predicated region
        $region61: #{tpu_custom_call.1} parent=43 // pred_check
          %p354 = pneg %p159
        $region62: #{tpu_custom_call.1} parent=43 // pred_check_branch
          %356 = sbr.rel (%p354) target = $region64
        $region63: #{tpu_custom_call.1} parent=43 // pred_region
          %357 = dma.done [#allocation9], 128
        $region64: #{tpu_custom_call.1} parent=43 // pred_fallthru
          _
        // Predicated region
        $region65: #{tpu_custom_call.1} parent=43 // pred_check
          %p358 = pneg %p180
        $region66: #{tpu_custom_call.1} parent=43 // pred_check_branch
          %360 = sbr.rel (%p358) target = $region68
        $region67: #{tpu_custom_call.1} parent=43 // pred_region
          %361 = dma.done [#allocation12], 128
        $region68: #{tpu_custom_call.1} parent=43 // pred_fallthru
          _
        %s362 = sand.u32 %s48, 1
        %s363 = scalar_lea.sflag [#allocation3], %s362
        %s364 = sand.u32 %s48, 1
        %s365 = smul.addr %s364, 2
        %s366 = scalar_lea.vmem [#allocation2], %s365
        %p367 = pneg %p61
        %p368 = pneg %p58
        %s369 = sand.u32 %s28, 1
        %s370 = scalar_lea.sflag [#allocation6], %s369
        %s371 = sand.u32 %s76, 1
        %s372 = smul.addr %s371, 8
        %s373 = scalar_lea.vmem [#allocation5], %s372
        %p374 = pneg %p89
        %p375 = pneg %p86
        %s376 = sand.u32 %s28, 1
        %s377 = scalar_lea.sflag [#allocation6], %s376
        %s378 = sand.u32 %s104, 1
        %s379 = smul.addr %s378, 8
        %s380 = scalar_lea.vmem [#allocation7], %s379
        %p381 = pneg %p117
        %p382 = pneg %p114
        %p383 = pneg %p138
        %p384 = pneg %p135
        %p385 = pneg %p159
        %p386 = pneg %p156
        %p387 = pneg %p180
        %p388 = pneg %p177
        %p389 = pneg %p208
        %p390 = pneg %p205
        %s391 = sand.u32 %s195, 1
        %s392 = scalar_lea.sflag [#allocation4], %s391
        %s393 = sand.u32 %s195, 1
        %s394 = smul.addr %s393, 8
        %s395 = scalar_lea.vmem [#allocation13], %s394
        %v397 = vld [vmem:[%s336] sm:$0xff]
        %v398 = vld [vmem:[%s327] sm:$0x3]
        %v399 = vld [vmem:[%s345] sm:$0xff]
        %v400 = vlaneseq
        %v401 = vshrl.u32 %v400, 7
        %v402 = vadd.s32 %v401, 8
        %v403 = vadd.s32 %v401, 16
        %v404 = vadd.s32 %v401, 24
        %v405 = vadd.s32 %v401, 32
        %v406 = vadd.s32 %v401, 40
        %v407 = vadd.s32 %v401, 48
        %v408 = vadd.s32 %v401, 56
        %v409 = vadd.s32 %v401, 64
        %v410 = vadd.s32 %v401, 72
        %v411 = vadd.s32 %v401, 80
        %v412 = vadd.s32 %v401, 88
        %v413 = vadd.s32 %v401, 96
        %v414 = vadd.s32 %v401, 104
        %v415 = vadd.s32 %v401, 112
        %v416 = vadd.s32 %v401, 120
        %v417 = vlaneseq
        %v418 = vshrl.u32 %v417, 7
        %v419 = vsub.s32 0, %v418
        %v420 = vrot.slane %v399, %v419
        %vm421 = vcmp.eq.s32.totalorder %v401, %v420
        %vm422 = vcmp.eq.s32.totalorder %v402, %v420
        %vm423 = vcmp.eq.s32.totalorder %v403, %v420
        %vm424 = vcmp.eq.s32.totalorder %v404, %v420
        %vm425 = vcmp.eq.s32.totalorder %v405, %v420
        %vm426 = vcmp.eq.s32.totalorder %v406, %v420
        %vm427 = vcmp.eq.s32.totalorder %v407, %v420
        %vm428 = vcmp.eq.s32.totalorder %v408, %v420
        %vm429 = vcmp.eq.s32.totalorder %v409, %v420
        %vm430 = vcmp.eq.s32.totalorder %v410, %v420
        %vm431 = vcmp.eq.s32.totalorder %v411, %v420
        %vm432 = vcmp.eq.s32.totalorder %v412, %v420
        %vm433 = vcmp.eq.s32.totalorder %v413, %v420
        %vm434 = vcmp.eq.s32.totalorder %v414, %v420
        %vm435 = vcmp.eq.s32.totalorder %v415, %v420
        %vm436 = vcmp.eq.s32.totalorder %v416, %v420
        %v437 = vlaneseq
        %v438 = vshrl.u32 %v437, 7
        %v439 = vsub.s32 0, %v438
        %v440 = vrot.slane %v397, %v439
        %vm441 = vcmp.eq.s32.totalorder %v401, %v440
        %vm442 = vcmp.eq.s32.totalorder %v402, %v440
        %vm443 = vcmp.eq.s32.totalorder %v403, %v440
        %vm444 = vcmp.eq.s32.totalorder %v404, %v440
        %vm445 = vcmp.eq.s32.totalorder %v405, %v440
        %vm446 = vcmp.eq.s32.totalorder %v406, %v440
        %vm447 = vcmp.eq.s32.totalorder %v407, %v440
        %vm448 = vcmp.eq.s32.totalorder %v408, %v440
        %vm449 = vcmp.eq.s32.totalorder %v409, %v440
        %vm450 = vcmp.eq.s32.totalorder %v410, %v440
        %vm451 = vcmp.eq.s32.totalorder %v411, %v440
        %vm452 = vcmp.eq.s32.totalorder %v412, %v440
        %vm453 = vcmp.eq.s32.totalorder %v413, %v440
        %vm454 = vcmp.eq.s32.totalorder %v414, %v440
        %vm455 = vcmp.eq.s32.totalorder %v415, %v440
        %vm456 = vcmp.eq.s32.totalorder %v416, %v440
        %v457 = vsel %vm421, 1, 0
        %v458 = vsel %vm422, 1, 0
        %v459 = vsel %vm423, 1, 0
        %v460 = vsel %vm424, 1, 0
        %v461 = vsel %vm425, 1, 0
        %v462 = vsel %vm426, 1, 0
        %v463 = vsel %vm427, 1, 0
        %v464 = vsel %vm428, 1, 0
        %v465 = vsel %vm429, 1, 0
        %v466 = vsel %vm430, 1, 0
        %v467 = vsel %vm431, 1, 0
        %v468 = vsel %vm432, 1, 0
        %v469 = vsel %vm433, 1, 0
        %v470 = vsel %vm434, 1, 0
        %v471 = vsel %vm435, 1, 0
        %v472 = vsel %vm436, 1, 0
        %v473 = vcvt.s32.f32 %v457
        %v474 = vcvt.s32.f32 %v458
        %v475 = vcvt.s32.f32 %v459
        %v476 = vcvt.s32.f32 %v460
        %v477 = vcvt.s32.f32 %v461
        %v478 = vcvt.s32.f32 %v462
        %v479 = vcvt.s32.f32 %v463
        %v480 = vcvt.s32.f32 %v464
        %v481 = vcvt.s32.f32 %v465
        %v482 = vcvt.s32.f32 %v466
        %v483 = vcvt.s32.f32 %v467
        %v484 = vcvt.s32.f32 %v468
        %v485 = vcvt.s32.f32 %v469
        %v486 = vcvt.s32.f32 %v470
        %v487 = vcvt.s32.f32 %v471
        %v488 = vcvt.s32.f32 %v472
        %v489 = vpack.c.bf16 %v474, %v473
        %v490 = vpack.c.bf16 %v476, %v475
        %v491 = vpack.c.bf16 %v478, %v477
        %v492 = vpack.c.bf16 %v480, %v479
        %v493 = vpack.c.bf16 %v482, %v481
        %v494 = vpack.c.bf16 %v484, %v483
        %v495 = vpack.c.bf16 %v486, %v485
        %v496 = vpack.c.bf16 %v488, %v487
        %v497 = vsel %vm441, 1, 0
        %v498 = vsel %vm442, 1, 0
        %v499 = vsel %vm443, 1, 0
        %v500 = vsel %vm444, 1, 0
        %v501 = vsel %vm445, 1, 0
        %v502 = vsel %vm446, 1, 0
        %v503 = vsel %vm447, 1, 0
        %v504 = vsel %vm448, 1, 0
        %v505 = vsel %vm449, 1, 0
        %v506 = vsel %vm450, 1, 0
        %v507 = vsel %vm451, 1, 0
        %v508 = vsel %vm452, 1, 0
        %v509 = vsel %vm453, 1, 0
        %v510 = vsel %vm454, 1, 0
        %v511 = vsel %vm455, 1, 0
        %v512 = vsel %vm456, 1, 0
        %v513 = vcvt.s32.f32 %v497
        %v514 = vcvt.s32.f32 %v498
        %v515 = vcvt.s32.f32 %v499
        %v516 = vcvt.s32.f32 %v500
        %v517 = vcvt.s32.f32 %v501
        %v518 = vcvt.s32.f32 %v502
        %v519 = vcvt.s32.f32 %v503
        %v520 = vcvt.s32.f32 %v504
        %v521 = vcvt.s32.f32 %v505
        %v522 = vcvt.s32.f32 %v506
        %v523 = vcvt.s32.f32 %v507
        %v524 = vcvt.s32.f32 %v508
        %v525 = vcvt.s32.f32 %v509
        %v526 = vcvt.s32.f32 %v510
        %v527 = vcvt.s32.f32 %v511
        %v528 = vcvt.s32.f32 %v512
        %v529 = vpack.c.bf16 %v514, %v513
        %v530 = vpack.c.bf16 %v516, %v515
        %v531 = vpack.c.bf16 %v518, %v517
        %v532 = vpack.c.bf16 %v520, %v519
        %v533 = vpack.c.bf16 %v522, %v521
        %v534 = vpack.c.bf16 %v524, %v523
        %v535 = vpack.c.bf16 %v526, %v525
        %v536 = vpack.c.bf16 %v528, %v527
        %v537 = vsub.bf16 %v489, %v529
        %v538 = vsub.bf16 %v490, %v530
        %v539 = vsub.bf16 %v491, %v531
        %v540 = vsub.bf16 %v492, %v532
        %v541 = vsub.bf16 %v493, %v533
        %v542 = vsub.bf16 %v494, %v534
        %v543 = vsub.bf16 %v495, %v535
        %v544 = vsub.bf16 %v496, %v536
        %545 = vmatprep.subr.bf16.mxu0 0
        %546 = vmatpush1.bf16.msra.mxu0 %v537
        %547 = vmatprep.subr.bf16.mxu0 0
        %548 = vmatpush1.bf16.msra.mxu0 %v538
        %549 = vmatprep.subr.bf16.mxu0 0
        %550 = vmatpush1.bf16.msra.mxu0 %v539
        %551 = vmatprep.subr.bf16.mxu0 0
        %552 = vmatpush1.bf16.msra.mxu0 %v540
        %553 = vmatprep.subr.bf16.mxu0 0
        %554 = vmatpush1.bf16.msra.mxu0 %v541
        %555 = vmatprep.subr.bf16.mxu0 0
        %556 = vmatpush1.bf16.msra.mxu0 %v542
        %557 = vmatprep.subr.bf16.mxu0 0
        %558 = vmatpush1.bf16.msra.mxu0 %v543
        %559 = vmatprep.subr.bf16.mxu0 0
        %560 = vmatpush1.bf16.msra.mxu0 %v544
        %561 = vmatprep.subr.bf16.mxu0 0
        %562 = vmatpush1.bf16.msra.mxu0 0
        %563 = vmatprep.subr.bf16.mxu0 0
        %564 = vmatpush1.bf16.msra.mxu0 0
        %565 = vmatprep.subr.bf16.mxu0 0
        %566 = vmatpush1.bf16.msra.mxu0 0
        %567 = vmatprep.subr.bf16.mxu0 0
        %568 = vmatpush1.bf16.msra.mxu0 0
        %569 = vmatprep.subr.bf16.mxu0 0
        %570 = vmatpush1.bf16.msra.mxu0 0
        %571 = vmatprep.subr.bf16.mxu0 0
        %572 = vmatpush1.bf16.msra.mxu0 0
        %573 = vmatprep.subr.bf16.mxu0 0
        %574 = vmatpush1.bf16.msra.mxu0 0
        %575 = vmatprep.subr.bf16.mxu0 0
        %576 = vmatpush1.bf16.msra.mxu0 0
        %577 = vmatprep.mubr.bf16.mxu0 0
        %578 = vmatmul.mubr.bf16.gmra.mrb[0].mxu0 %v398
        %v579 = vpop.f32.mrb[0].mxu0
        %v580 = vadd.f32 0.0, %v579
        %v581 = vpop.f32.mrb[0].mxu0
        %v582 = vpop.f32.mrb[0].mxu0
        %v583 = vpop.f32.mrb[0].mxu0
        %584 = vdwg.mxu0
        %v585 = vlaneseq
        %v586 = vshrl.u32 %v585, 7
        %v587 = vsub.s32 1, %v586
        %v588 = vrot.slane %v399, %v587
        %vm589 = vcmp.eq.s32.totalorder %v401, %v588
        %vm590 = vcmp.eq.s32.totalorder %v402, %v588
        %vm591 = vcmp.eq.s32.totalorder %v403, %v588
        %vm592 = vcmp.eq.s32.totalorder %v404, %v588
        %vm593 = vcmp.eq.s32.totalorder %v405, %v588
        %vm594 = vcmp.eq.s32.totalorder %v406, %v588
        %vm595 = vcmp.eq.s32.totalorder %v407, %v588
        %vm596 = vcmp.eq.s32.totalorder %v408, %v588
        %vm597 = vcmp.eq.s32.totalorder %v409, %v588
        %vm598 = vcmp.eq.s32.totalorder %v410, %v588
        %vm599 = vcmp.eq.s32.totalorder %v411, %v588
        %vm600 = vcmp.eq.s32.totalorder %v412, %v588
        %vm601 = vcmp.eq.s32.totalorder %v413, %v588
        %vm602 = vcmp.eq.s32.totalorder %v414, %v588
        %vm603 = vcmp.eq.s32.totalorder %v415, %v588
        %vm604 = vcmp.eq.s32.totalorder %v416, %v588
        %v605 = vlaneseq
        %v606 = vshrl.u32 %v605, 7
        %v607 = vsub.s32 1, %v606
        %v608 = vrot.slane %v397, %v607
        %vm609 = vcmp.eq.s32.totalorder %v401, %v608
        %vm610 = vcmp.eq.s32.totalorder %v402, %v608
        %vm611 = vcmp.eq.s32.totalorder %v403, %v608
        %vm612 = vcmp.eq.s32.totalorder %v404, %v608
        %vm613 = vcmp.eq.s32.totalorder %v405, %v608
        %vm614 = vcmp.eq.s32.totalorder %v406, %v608
        %vm615 = vcmp.eq.s32.totalorder %v407, %v608
        %vm616 = vcmp.eq.s32.totalorder %v408, %v608
        %vm617 = vcmp.eq.s32.totalorder %v409, %v608
        %vm618 = vcmp.eq.s32.totalorder %v410, %v608
        %vm619 = vcmp.eq.s32.totalorder %v411, %v608
        %vm620 = vcmp.eq.s32.totalorder %v412, %v608
        %vm621 = vcmp.eq.s32.totalorder %v413, %v608
        %vm622 = vcmp.eq.s32.totalorder %v414, %v608
        %vm623 = vcmp.eq.s32.totalorder %v415, %v608
        %vm624 = vcmp.eq.s32.totalorder %v416, %v608
        %v625 = vsel %vm589, 1, 0
        %v626 = vsel %vm590, 1, 0
        %v627 = vsel %vm591, 1, 0
        %v628 = vsel %vm592, 1, 0
        %v629 = vsel %vm593, 1, 0
        %v630 = vsel %vm594, 1, 0
        %v631 = vsel %vm595, 1, 0
        %v632 = vsel %vm596, 1, 0
        %v633 = vsel %vm597, 1, 0
        %v634 = vsel %vm598, 1, 0
        %v635 = vsel %vm599, 1, 0
        %v636 = vsel %vm600, 1, 0
        %v637 = vsel %vm601, 1, 0
        %v638 = vsel %vm602, 1, 0
        %v639 = vsel %vm603, 1, 0
        %v640 = vsel %vm604, 1, 0
        %v641 = vcvt.s32.f32 %v625
        %v642 = vcvt.s32.f32 %v626
        %v643 = vcvt.s32.f32 %v627
        %v644 = vcvt.s32.f32 %v628
        %v645 = vcvt.s32.f32 %v629
        %v646 = vcvt.s32.f32 %v630
        %v647 = vcvt.s32.f32 %v631
        %v648 = vcvt.s32.f32 %v632
        %v649 = vcvt.s32.f32 %v633
        %v650 = vcvt.s32.f32 %v634
        %v651 = vcvt.s32.f32 %v635
        %v652 = vcvt.s32.f32 %v636
        %v653 = vcvt.s32.f32 %v637
        %v654 = vcvt.s32.f32 %v638
        %v655 = vcvt.s32.f32 %v639
        %v656 = vcvt.s32.f32 %v640
        %v657 = vpack.c.bf16 %v642, %v641
        %v658 = vpack.c.bf16 %v644, %v643
        %v659 = vpack.c.bf16 %v646, %v645
        %v660 = vpack.c.bf16 %v648, %v647
        %v661 = vpack.c.bf16 %v650, %v649
        %v662 = vpack.c.bf16 %v652, %v651
        %v663 = vpack.c.bf16 %v654, %v653
        %v664 = vpack.c.bf16 %v656, %v655
        %v665 = vsel %vm609, 1, 0
        %v666 = vsel %vm610, 1, 0
        %v667 = vsel %vm611, 1, 0
        %v668 = vsel %vm612, 1, 0
        %v669 = vsel %vm613, 1, 0
        %v670 = vsel %vm614, 1, 0
        %v671 = vsel %vm615, 1, 0
        %v672 = vsel %vm616, 1, 0
        %v673 = vsel %vm617, 1, 0
        %v674 = vsel %vm618, 1, 0
        %v675 = vsel %vm619, 1, 0
        %v676 = vsel %vm620, 1, 0
        %v677 = vsel %vm621, 1, 0
        %v678 = vsel %vm622, 1, 0
        %v679 = vsel %vm623, 1, 0
        %v680 = vsel %vm624, 1, 0
        %v681 = vcvt.s32.f32 %v665
        %v682 = vcvt.s32.f32 %v666
        %v683 = vcvt.s32.f32 %v667
        %v684 = vcvt.s32.f32 %v668
        %v685 = vcvt.s32.f32 %v669
        %v686 = vcvt.s32.f32 %v670
        %v687 = vcvt.s32.f32 %v671
        %v688 = vcvt.s32.f32 %v672
        %v689 = vcvt.s32.f32 %v673
        %v690 = vcvt.s32.f32 %v674
        %v691 = vcvt.s32.f32 %v675
        %v692 = vcvt.s32.f32 %v676
        %v693 = vcvt.s32.f32 %v677
        %v694 = vcvt.s32.f32 %v678
        %v695 = vcvt.s32.f32 %v679
        %v696 = vcvt.s32.f32 %v680
        %v697 = vpack.c.bf16 %v682, %v681
        %v698 = vpack.c.bf16 %v684, %v683
        %v699 = vpack.c.bf16 %v686, %v685
        %v700 = vpack.c.bf16 %v688, %v687
        %v701 = vpack.c.bf16 %v690, %v689
        %v702 = vpack.c.bf16 %v692, %v691
        %v703 = vpack.c.bf16 %v694, %v693
        %v704 = vpack.c.bf16 %v696, %v695
        %v705 = vsub.bf16 %v657, %v697
        %v706 = vsub.bf16 %v658, %v698
        %v707 = vsub.bf16 %v659, %v699
        %v708 = vsub.bf16 %v660, %v700
        %v709 = vsub.bf16 %v661, %v701
        %v710 = vsub.bf16 %v662, %v702
        %v711 = vsub.bf16 %v663, %v703
        %v712 = vsub.bf16 %v664, %v704
        %713 = vmatprep.subr.bf16.mxu0 0
        %714 = vmatpush1.bf16.msra.mxu0 %v705
        %715 = vmatprep.subr.bf16.mxu0 0
        %716 = vmatpush1.bf16.msra.mxu0 %v706
        %717 = vmatprep.subr.bf16.mxu0 0
        %718 = vmatpush1.bf16.msra.mxu0 %v707
        %719 = vmatprep.subr.bf16.mxu0 0
        %720 = vmatpush1.bf16.msra.mxu0 %v708
        %721 = vmatprep.subr.bf16.mxu0 0
        %722 = vmatpush1.bf16.msra.mxu0 %v709
        %723 = vmatprep.subr.bf16.mxu0 0
        %724 = vmatpush1.bf16.msra.mxu0 %v710
        %725 = vmatprep.subr.bf16.mxu0 0
        %726 = vmatpush1.bf16.msra.mxu0 %v711
        %727 = vmatprep.subr.bf16.mxu0 0
        %728 = vmatpush1.bf16.msra.mxu0 %v712
        %729 = vmatprep.subr.bf16.mxu0 0
        %730 = vmatpush1.bf16.msra.mxu0 0
        %731 = vmatprep.subr.bf16.mxu0 0
        %732 = vmatpush1.bf16.msra.mxu0 0
        %733 = vmatprep.subr.bf16.mxu0 0
        %734 = vmatpush1.bf16.msra.mxu0 0
        %735 = vmatprep.subr.bf16.mxu0 0
        %736 = vmatpush1.bf16.msra.mxu0 0
        %737 = vmatprep.subr.bf16.mxu0 0
        %738 = vmatpush1.bf16.msra.mxu0 0
        %739 = vmatprep.subr.bf16.mxu0 0
        %740 = vmatpush1.bf16.msra.mxu0 0
        %741 = vmatprep.subr.bf16.mxu0 0
        %742 = vmatpush1.bf16.msra.mxu0 0
        %743 = vmatprep.subr.bf16.mxu0 0
        %744 = vmatpush1.bf16.msra.mxu0 0
        %745 = vmatprep.mubr.bf16.mxu0 0
        %746 = vmatmul.mubr.bf16.gmra.mrb[0].mxu0 %v398
        %v747 = vpop.f32.mrb[0].mxu0
        %v748 = vadd.f32 0.0, %v747
        %v749 = vpop.f32.mrb[0].mxu0
        %v750 = vpop.f32.mrb[0].mxu0
        %v751 = vpop.f32.mrb[0].mxu0
        %752 = vdwg.mxu0
        %v753 = vmax.f32 %v580, %v748
        %v754 = vlaneseq
        %v755 = vshrl.u32 %v754, 7
        %v756 = vsub.s32 2, %v755
        %v757 = vrot.slane %v399, %v756
        %vm758 = vcmp.eq.s32.totalorder %v401, %v757
        %vm759 = vcmp.eq.s32.totalorder %v402, %v757
        %vm760 = vcmp.eq.s32.totalorder %v403, %v757
        %vm761 = vcmp.eq.s32.totalorder %v404, %v757
        %vm762 = vcmp.eq.s32.totalorder %v405, %v757
        %vm763 = vcmp.eq.s32.totalorder %v406, %v757
        %vm764 = vcmp.eq.s32.totalorder %v407, %v757
        %vm765 = vcmp.eq.s32.totalorder %v408, %v757
        %vm766 = vcmp.eq.s32.totalorder %v409, %v757
        %vm767 = vcmp.eq.s32.totalorder %v410, %v757
        %vm768 = vcmp.eq.s32.totalorder %v411, %v757
        %vm769 = vcmp.eq.s32.totalorder %v412, %v757
        %vm770 = vcmp.eq.s32.totalorder %v413, %v757
        %vm771 = vcmp.eq.s32.totalorder %v414, %v757
        %vm772 = vcmp.eq.s32.totalorder %v415, %v757
        %vm773 = vcmp.eq.s32.totalorder %v416, %v757
        %v774 = vlaneseq
        %v775 = vshrl.u32 %v774, 7
        %v776 = vsub.s32 2, %v775
        %v777 = vrot.slane %v397, %v776
        %vm778 = vcmp.eq.s32.totalorder %v401, %v777
        %vm779 = vcmp.eq.s32.totalorder %v402, %v777
        %vm780 = vcmp.eq.s32.totalorder %v403, %v777
        %vm781 = vcmp.eq.s32.totalorder %v404, %v777
        %vm782 = vcmp.eq.s32.totalorder %v405, %v777
        %vm783 = vcmp.eq.s32.totalorder %v406, %v777
        %vm784 = vcmp.eq.s32.totalorder %v407, %v777
        %vm785 = vcmp.eq.s32.totalorder %v408, %v777
        %vm786 = vcmp.eq.s32.totalorder %v409, %v777
        %vm787 = vcmp.eq.s32.totalorder %v410, %v777
        %vm788 = vcmp.eq.s32.totalorder %v411, %v777
        %vm789 = vcmp.eq.s32.totalorder %v412, %v777
        %vm790 = vcmp.eq.s32.totalorder %v413, %v777
        %vm791 = vcmp.eq.s32.totalorder %v414, %v777
        %vm792 = vcmp.eq.s32.totalorder %v415, %v777
        %vm793 = vcmp.eq.s32.totalorder %v416, %v777
        %v794 = vsel %vm758, 1, 0
        %v795 = vsel %vm759, 1, 0
        %v796 = vsel %vm760, 1, 0
        %v797 = vsel %vm761, 1, 0
        %v798 = vsel %vm762, 1, 0
        %v799 = vsel %vm763, 1, 0
        %v800 = vsel %vm764, 1, 0
        %v801 = vsel %vm765, 1, 0
        %v802 = vsel %vm766, 1, 0
        %v803 = vsel %vm767, 1, 0
        %v804 = vsel %vm768, 1, 0
        %v805 = vsel %vm769, 1, 0
        %v806 = vsel %vm770, 1, 0
        %v807 = vsel %vm771, 1, 0
        %v808 = vsel %vm772, 1, 0
        %v809 = vsel %vm773, 1, 0
        %v810 = vcvt.s32.f32 %v794
        %v811 = vcvt.s32.f32 %v795
        %v812 = vcvt.s32.f32 %v796
        %v813 = vcvt.s32.f32 %v797
        %v814 = vcvt.s32.f32 %v798
        %v815 = vcvt.s32.f32 %v799
        %v816 = vcvt.s32.f32 %v800
        %v817 = vcvt.s32.f32 %v801
        %v818 = vcvt.s32.f32 %v802
        %v819 = vcvt.s32.f32 %v803
        %v820 = vcvt.s32.f32 %v804
        %v821 = vcvt.s32.f32 %v805
        %v822 = vcvt.s32.f32 %v806
        %v823 = vcvt.s32.f32 %v807
        %v824 = vcvt.s32.f32 %v808
        %v825 = vcvt.s32.f32 %v809
        %v826 = vpack.c.bf16 %v811, %v810
        %v827 = vpack.c.bf16 %v813, %v812
        %v828 = vpack.c.bf16 %v815, %v814
        %v829 = vpack.c.bf16 %v817, %v816
        %v830 = vpack.c.bf16 %v819, %v818
        %v831 = vpack.c.bf16 %v821, %v820
        %v832 = vpack.c.bf16 %v823, %v822
        %v833 = vpack.c.bf16 %v825, %v824
        %v834 = vsel %vm778, 1, 0
        %v835 = vsel %vm779, 1, 0
        %v836 = vsel %vm780, 1, 0
        %v837 = vsel %vm781, 1, 0
        %v838 = vsel %vm782, 1, 0
        %v839 = vsel %vm783, 1, 0
        %v840 = vsel %vm784, 1, 0
        %v841 = vsel %vm785, 1, 0
        %v842 = vsel %vm786, 1, 0
        %v843 = vsel %vm787, 1, 0
        %v844 = vsel %vm788, 1, 0
        %v845 = vsel %vm789, 1, 0
        %v846 = vsel %vm790, 1, 0
        %v847 = vsel %vm791, 1, 0
        %v848 = vsel %vm792, 1, 0
        %v849 = vsel %vm793, 1, 0
        %v850 = vcvt.s32.f32 %v834
        %v851 = vcvt.s32.f32 %v835
        %v852 = vcvt.s32.f32 %v836
        %v853 = vcvt.s32.f32 %v837
        %v854 = vcvt.s32.f32 %v838
        %v855 = vcvt.s32.f32 %v839
        %v856 = vcvt.s32.f32 %v840
        %v857 = vcvt.s32.f32 %v841
        %v858 = vcvt.s32.f32 %v842
        %v859 = vcvt.s32.f32 %v843
        %v860 = vcvt.s32.f32 %v844
        %v861 = vcvt.s32.f32 %v845
        %v862 = vcvt.s32.f32 %v846
        %v863 = vcvt.s32.f32 %v847
        %v864 = vcvt.s32.f32 %v848
        %v865 = vcvt.s32.f32 %v849
        %v866 = vpack.c.bf16 %v851, %v850
        %v867 = vpack.c.bf16 %v853, %v852
        %v868 = vpack.c.bf16 %v855, %v854
        %v869 = vpack.c.bf16 %v857, %v856
        %v870 = vpack.c.bf16 %v859, %v858
        %v871 = vpack.c.bf16 %v861, %v860
        %v872 = vpack.c.bf16 %v863, %v862
        %v873 = vpack.c.bf16 %v865, %v864
        %v874 = vsub.bf16 %v826, %v866
        %v875 = vsub.bf16 %v827, %v867
        %v876 = vsub.bf16 %v828, %v868
        %v877 = vsub.bf16 %v829, %v869
        %v878 = vsub.bf16 %v830, %v870
        %v879 = vsub.bf16 %v831, %v871
        %v880 = vsub.bf16 %v832, %v872
        %v881 = vsub.bf16 %v833, %v873
        %882 = vmatprep.subr.bf16.mxu0 0
        %883 = vmatpush1.bf16.msra.mxu0 %v874
        %884 = vmatprep.subr.bf16.mxu0 0
        %885 = vmatpush1.bf16.msra.mxu0 %v875
        %886 = vmatprep.subr.bf16.mxu0 0
        %887 = vmatpush1.bf16.msra.mxu0 %v876
        %888 = vmatprep.subr.bf16.mxu0 0
        %889 = vmatpush1.bf16.msra.mxu0 %v877
        %890 = vmatprep.subr.bf16.mxu0 0
        %891 = vmatpush1.bf16.msra.mxu0 %v878
        %892 = vmatprep.subr.bf16.mxu0 0
        %893 = vmatpush1.bf16.msra.mxu0 %v879
        %894 = vmatprep.subr.bf16.mxu0 0
        %895 = vmatpush1.bf16.msra.mxu0 %v880
        %896 = vmatprep.subr.bf16.mxu0 0
        %897 = vmatpush1.bf16.msra.mxu0 %v881
        %898 = vmatprep.subr.bf16.mxu0 0
        %899 = vmatpush1.bf16.msra.mxu0 0
        %900 = vmatprep.subr.bf16.mxu0 0
        %901 = vmatpush1.bf16.msra.mxu0 0
        %902 = vmatprep.subr.bf16.mxu0 0
        %903 = vmatpush1.bf16.msra.mxu0 0
        %904 = vmatprep.subr.bf16.mxu0 0
        %905 = vmatpush1.bf16.msra.mxu0 0
        %906 = vmatprep.subr.bf16.mxu0 0
        %907 = vmatpush1.bf16.msra.mxu0 0
        %908 = vmatprep.subr.bf16.mxu0 0
        %909 = vmatpush1.bf16.msra.mxu0 0
        %910 = vmatprep.subr.bf16.mxu0 0
        %911 = vmatpush1.bf16.msra.mxu0 0
        %912 = vmatprep.subr.bf16.mxu0 0
        %913 = vmatpush1.bf16.msra.mxu0 0
        %914 = vmatprep.mubr.bf16.mxu0 0
        %915 = vmatmul.mubr.bf16.gmra.mrb[0].mxu0 %v398
        %v916 = vpop.f32.mrb[0].mxu0
        %v917 = vadd.f32 0.0, %v916
        %v918 = vpop.f32.mrb[0].mxu0
        %v919 = vpop.f32.mrb[0].mxu0
        %v920 = vpop.f32.mrb[0].mxu0
        %921 = vdwg.mxu0
        %v922 = vmax.f32 %v753, %v917
        %v923 = vlaneseq
        %v924 = vshrl.u32 %v923, 7
        %v925 = vsub.s32 3, %v924
        %v926 = vrot.slane %v399, %v925
        %vm927 = vcmp.eq.s32.totalorder %v401, %v926
        %vm928 = vcmp.eq.s32.totalorder %v402, %v926
        %vm929 = vcmp.eq.s32.totalorder %v403, %v926
        %vm930 = vcmp.eq.s32.totalorder %v404, %v926
        %vm931 = vcmp.eq.s32.totalorder %v405, %v926
        %vm932 = vcmp.eq.s32.totalorder %v406, %v926
        %vm933 = vcmp.eq.s32.totalorder %v407, %v926
        %vm934 = vcmp.eq.s32.totalorder %v408, %v926
        %vm935 = vcmp.eq.s32.totalorder %v409, %v926
        %vm936 = vcmp.eq.s32.totalorder %v410, %v926
        %vm937 = vcmp.eq.s32.totalorder %v411, %v926
        %vm938 = vcmp.eq.s32.totalorder %v412, %v926
        %vm939 = vcmp.eq.s32.totalorder %v413, %v926
        %vm940 = vcmp.eq.s32.totalorder %v414, %v926
        %vm941 = vcmp.eq.s32.totalorder %v415, %v926
        %vm942 = vcmp.eq.s32.totalorder %v416, %v926
        %v943 = vlaneseq
        %v944 = vshrl.u32 %v943, 7
        %v945 = vsub.s32 3, %v944
        %v946 = vrot.slane %v397, %v945
        %vm947 = vcmp.eq.s32.totalorder %v401, %v946
        %vm948 = vcmp.eq.s32.totalorder %v402, %v946
        %vm949 = vcmp.eq.s32.totalorder %v403, %v946
        %vm950 = vcmp.eq.s32.totalorder %v404, %v946
        %vm951 = vcmp.eq.s32.totalorder %v405, %v946
        %vm952 = vcmp.eq.s32.totalorder %v406, %v946
        %vm953 = vcmp.eq.s32.totalorder %v407, %v946
        %vm954 = vcmp.eq.s32.totalorder %v408, %v946
        %vm955 = vcmp.eq.s32.totalorder %v409, %v946
        %vm956 = vcmp.eq.s32.totalorder %v410, %v946
        %vm957 = vcmp.eq.s32.totalorder %v411, %v946
        %vm958 = vcmp.eq.s32.totalorder %v412, %v946
        %vm959 = vcmp.eq.s32.totalorder %v413, %v946
        %vm960 = vcmp.eq.s32.totalorder %v414, %v946
        %vm961 = vcmp.eq.s32.totalorder %v415, %v946
        %vm962 = vcmp.eq.s32.totalorder %v416, %v946
        %v963 = vsel %vm927, 1, 0
        %v964 = vsel %vm928, 1, 0
        %v965 = vsel %vm929, 1, 0
        %v966 = vsel %vm930, 1, 0
        %v967 = vsel %vm931, 1, 0
        %v968 = vsel %vm932, 1, 0
        %v969 = vsel %vm933, 1, 0
        %v970 = vsel %vm934, 1, 0
        %v971 = vsel %vm935, 1, 0
        %v972 = vsel %vm936, 1, 0
        %v973 = vsel %vm937, 1, 0
        %v974 = vsel %vm938, 1, 0
        %v975 = vsel %vm939, 1, 0
        %v976 = vsel %vm940, 1, 0
        %v977 = vsel %vm941, 1, 0
        %v978 = vsel %vm942, 1, 0
        %v979 = vcvt.s32.f32 %v963
        %v980 = vcvt.s32.f32 %v964
        %v981 = vcvt.s32.f32 %v965
        %v982 = vcvt.s32.f32 %v966
        %v983 = vcvt.s32.f32 %v967
        %v984 = vcvt.s32.f32 %v968
        %v985 = vcvt.s32.f32 %v969
        %v986 = vcvt.s32.f32 %v970
        %v987 = vcvt.s32.f32 %v971
        %v988 = vcvt.s32.f32 %v972
        %v989 = vcvt.s32.f32 %v973
        %v990 = vcvt.s32.f32 %v974
        %v991 = vcvt.s32.f32 %v975
        %v992 = vcvt.s32.f32 %v976
        %v993 = vcvt.s32.f32 %v977
        %v994 = vcvt.s32.f32 %v978
        %v995 = vpack.c.bf16 %v980, %v979
        %v996 = vpack.c.bf16 %v982, %v981
        %v997 = vpack.c.bf16 %v984, %v983
        %v998 = vpack.c.bf16 %v986, %v985
        %v999 = vpack.c.bf16 %v988, %v987
        %v1000 = vpack.c.bf16 %v990, %v989
        %v1001 = vpack.c.bf16 %v992, %v991
        %v1002 = vpack.c.bf16 %v994, %v993
        %v1003 = vsel %vm947, 1, 0
        %v1004 = vsel %vm948, 1, 0
        %v1005 = vsel %vm949, 1, 0
        %v1006 = vsel %vm950, 1, 0
        %v1007 = vsel %vm951, 1, 0
        %v1008 = vsel %vm952, 1, 0
        %v1009 = vsel %vm953, 1, 0
        %v1010 = vsel %vm954, 1, 0
        %v1011 = vsel %vm955, 1, 0
        %v1012 = vsel %vm956, 1, 0
        %v1013 = vsel %vm957, 1, 0
        %v1014 = vsel %vm958, 1, 0
        %v1015 = vsel %vm959, 1, 0
        %v1016 = vsel %vm960, 1, 0
        %v1017 = vsel %vm961, 1, 0
        %v1018 = vsel %vm962, 1, 0
        %v1019 = vcvt.s32.f32 %v1003
        %v1020 = vcvt.s32.f32 %v1004
        %v1021 = vcvt.s32.f32 %v1005
        %v1022 = vcvt.s32.f32 %v1006
        %v1023 = vcvt.s32.f32 %v1007
        %v1024 = vcvt.s32.f32 %v1008
        %v1025 = vcvt.s32.f32 %v1009
        %v1026 = vcvt.s32.f32 %v1010
        %v1027 = vcvt.s32.f32 %v1011
        %v1028 = vcvt.s32.f32 %v1012
        %v1029 = vcvt.s32.f32 %v1013
        %v1030 = vcvt.s32.f32 %v1014
        %v1031 = vcvt.s32.f32 %v1015
        %v1032 = vcvt.s32.f32 %v1016
        %v1033 = vcvt.s32.f32 %v1017
        %v1034 = vcvt.s32.f32 %v1018
        %v1035 = vpack.c.bf16 %v1020, %v1019
        %v1036 = vpack.c.bf16 %v1022, %v1021
        %v1037 = vpack.c.bf16 %v1024, %v1023
        %v1038 = vpack.c.bf16 %v1026, %v1025
        %v1039 = vpack.c.bf16 %v1028, %v1027
        %v1040 = vpack.c.bf16 %v1030, %v1029
        %v1041 = vpack.c.bf16 %v1032, %v1031
        %v1042 = vpack.c.bf16 %v1034, %v1033
        %v1043 = vsub.bf16 %v995, %v1035
        %v1044 = vsub.bf16 %v996, %v1036
        %v1045 = vsub.bf16 %v997, %v1037
        %v1046 = vsub.bf16 %v998, %v1038
        %v1047 = vsub.bf16 %v999, %v1039
        %v1048 = vsub.bf16 %v1000, %v1040
        %v1049 = vsub.bf16 %v1001, %v1041
        %v1050 = vsub.bf16 %v1002, %v1042
        %1051 = vmatprep.subr.bf16.mxu0 0
        %1052 = vmatpush1.bf16.msra.mxu0 %v1043
        %1053 = vmatprep.subr.bf16.mxu0 0
        %1054 = vmatpush1.bf16.msra.mxu0 %v1044
        %1055 = vmatprep.subr.bf16.mxu0 0
        %1056 = vmatpush1.bf16.msra.mxu0 %v1045
        %1057 = vmatprep.subr.bf16.mxu0 0
        %1058 = vmatpush1.bf16.msra.mxu0 %v1046
        %1059 = vmatprep.subr.bf16.mxu0 0
        %1060 = vmatpush1.bf16.msra.mxu0 %v1047
        %1061 = vmatprep.subr.bf16.mxu0 0
        %1062 = vmatpush1.bf16.msra.mxu0 %v1048
        %1063 = vmatprep.subr.bf16.mxu0 0
        %1064 = vmatpush1.bf16.msra.mxu0 %v1049
        %1065 = vmatprep.subr.bf16.mxu0 0
        %1066 = vmatpush1.bf16.msra.mxu0 %v1050
        %1067 = vmatprep.subr.bf16.mxu0 0
        %1068 = vmatpush1.bf16.msra.mxu0 0
        %1069 = vmatprep.subr.bf16.mxu0 0
        %1070 = vmatpush1.bf16.msra.mxu0 0
        %1071 = vmatprep.subr.bf16.mxu0 0
        %1072 = vmatpush1.bf16.msra.mxu0 0
        %1073 = vmatprep.subr.bf16.mxu0 0
        %1074 = vmatpush1.bf16.msra.mxu0 0
        %1075 = vmatprep.subr.bf16.mxu0 0
        %1076 = vmatpush1.bf16.msra.mxu0 0
        %1077 = vmatprep.subr.bf16.mxu0 0
        %1078 = vmatpush1.bf16.msra.mxu0 0
        %1079 = vmatprep.subr.bf16.mxu0 0
        %1080 = vmatpush1.bf16.msra.mxu0 0
        %1081 = vmatprep.subr.bf16.mxu0 0
        %1082 = vmatpush1.bf16.msra.mxu0 0
        %1083 = vmatprep.mubr.bf16.mxu0 0
        %1084 = vmatmul.mubr.bf16.gmra.mrb[0].mxu0 %v398
        %v1085 = vpop.f32.mrb[0].mxu0
        %v1086 = vadd.f32 0.0, %v1085
        %v1087 = vpop.f32.mrb[0].mxu0
        %v1088 = vpop.f32.mrb[0].mxu0
        %v1089 = vpop.f32.mrb[0].mxu0
        %1090 = vdwg.mxu0
        %v1091 = vmax.f32 %v922, %v1086
        %v1092 = vlaneseq
        %v1093 = vshrl.u32 %v1092, 7
        %v1094 = vsub.s32 4, %v1093
        %v1095 = vrot.slane %v399, %v1094
        %vm1096 = vcmp.eq.s32.totalorder %v401, %v1095
        %vm1097 = vcmp.eq.s32.totalorder %v402, %v1095
        %vm1098 = vcmp.eq.s32.totalorder %v403, %v1095
        %vm1099 = vcmp.eq.s32.totalorder %v404, %v1095
        %vm1100 = vcmp.eq.s32.totalorder %v405, %v1095
        %vm1101 = vcmp.eq.s32.totalorder %v406, %v1095
        %vm1102 = vcmp.eq.s32.totalorder %v407, %v1095
        %vm1103 = vcmp.eq.s32.totalorder %v408, %v1095
        %vm1104 = vcmp.eq.s32.totalorder %v409, %v1095
        %vm1105 = vcmp.eq.s32.totalorder %v410, %v1095
        %vm1106 = vcmp.eq.s32.totalorder %v411, %v1095
        %vm1107 = vcmp.eq.s32.totalorder %v412, %v1095
        %vm1108 = vcmp.eq.s32.totalorder %v413, %v1095
        %vm1109 = vcmp.eq.s32.totalorder %v414, %v1095
        %vm1110 = vcmp.eq.s32.totalorder %v415, %v1095
        %vm1111 = vcmp.eq.s32.totalorder %v416, %v1095
        %v1112 = vlaneseq
        %v1113 = vshrl.u32 %v1112, 7
        %v1114 = vsub.s32 4, %v1113
        %v1115 = vrot.slane %v397, %v1114
        %vm1116 = vcmp.eq.s32.totalorder %v401, %v1115
        %vm1117 = vcmp.eq.s32.totalorder %v402, %v1115
        %vm1118 = vcmp.eq.s32.totalorder %v403, %v1115
        %vm1119 = vcmp.eq.s32.totalorder %v404, %v1115
        %vm1120 = vcmp.eq.s32.totalorder %v405, %v1115
        %vm1121 = vcmp.eq.s32.totalorder %v406, %v1115
        %vm1122 = vcmp.eq.s32.totalorder %v407, %v1115
        %vm1123 = vcmp.eq.s32.totalorder %v408, %v1115
        %vm1124 = vcmp.eq.s32.totalorder %v409, %v1115
        %vm1125 = vcmp.eq.s32.totalorder %v410, %v1115
        %vm1126 = vcmp.eq.s32.totalorder %v411, %v1115
        %vm1127 = vcmp.eq.s32.totalorder %v412, %v1115
        %vm1128 = vcmp.eq.s32.totalorder %v413, %v1115
        %vm1129 = vcmp.eq.s32.totalorder %v414, %v1115
        %vm1130 = vcmp.eq.s32.totalorder %v415, %v1115
        %vm1131 = vcmp.eq.s32.totalorder %v416, %v1115
        %v1132 = vsel %vm1096, 1, 0
        %v1133 = vsel %vm1097, 1, 0
        %v1134 = vsel %vm1098, 1, 0
        %v1135 = vsel %vm1099, 1, 0
        %v1136 = vsel %vm1100, 1, 0
        %v1137 = vsel %vm1101, 1, 0
        %v1138 = vsel %vm1102, 1, 0
        %v1139 = vsel %vm1103, 1, 0
        %v1140 = vsel %vm1104, 1, 0
        %v1141 = vsel %vm1105, 1, 0
        %v1142 = vsel %vm1106, 1, 0
        %v1143 = vsel %vm1107, 1, 0
        %v1144 = vsel %vm1108, 1, 0
        %v1145 = vsel %vm1109, 1, 0
        %v1146 = vsel %vm1110, 1, 0
        %v1147 = vsel %vm1111, 1, 0
        %v1148 = vcvt.s32.f32 %v1132
        %v1149 = vcvt.s32.f32 %v1133
        %v1150 = vcvt.s32.f32 %v1134
        %v1151 = vcvt.s32.f32 %v1135
        %v1152 = vcvt.s32.f32 %v1136
        %v1153 = vcvt.s32.f32 %v1137
        %v1154 = vcvt.s32.f32 %v1138
        %v1155 = vcvt.s32.f32 %v1139
        %v1156 = vcvt.s32.f32 %v1140
        %v1157 = vcvt.s32.f32 %v1141
        %v1158 = vcvt.s32.f32 %v1142
        %v1159 = vcvt.s32.f32 %v1143
        %v1160 = vcvt.s32.f32 %v1144
        %v1161 = vcvt.s32.f32 %v1145
        %v1162 = vcvt.s32.f32 %v1146
        %v1163 = vcvt.s32.f32 %v1147
        %v1164 = vpack.c.bf16 %v1149, %v1148
        %v1165 = vpack.c.bf16 %v1151, %v1150
        %v1166 = vpack.c.bf16 %v1153, %v1152
        %v1167 = vpack.c.bf16 %v1155, %v1154
        %v1168 = vpack.c.bf16 %v1157, %v1156
        %v1169 = vpack.c.bf16 %v1159, %v1158
        %v1170 = vpack.c.bf16 %v1161, %v1160
        %v1171 = vpack.c.bf16 %v1163, %v1162
        %v1172 = vsel %vm1116, 1, 0
        %v1173 = vsel %vm1117, 1, 0
        %v1174 = vsel %vm1118, 1, 0
        %v1175 = vsel %vm1119, 1, 0
        %v1176 = vsel %vm1120, 1, 0
        %v1177 = vsel %vm1121, 1, 0
        %v1178 = vsel %vm1122, 1, 0
        %v1179 = vsel %vm1123, 1, 0
        %v1180 = vsel %vm1124, 1, 0
        %v1181 = vsel %vm1125, 1, 0
        %v1182 = vsel %vm1126, 1, 0
        %v1183 = vsel %vm1127, 1, 0
        %v1184 = vsel %vm1128, 1, 0
        %v1185 = vsel %vm1129, 1, 0
        %v1186 = vsel %vm1130, 1, 0
        %v1187 = vsel %vm1131, 1, 0
        %v1188 = vcvt.s32.f32 %v1172
        %v1189 = vcvt.s32.f32 %v1173
        %v1190 = vcvt.s32.f32 %v1174
        %v1191 = vcvt.s32.f32 %v1175
        %v1192 = vcvt.s32.f32 %v1176
        %v1193 = vcvt.s32.f32 %v1177
        %v1194 = vcvt.s32.f32 %v1178
        %v1195 = vcvt.s32.f32 %v1179
        %v1196 = vcvt.s32.f32 %v1180
        %v1197 = vcvt.s32.f32 %v1181
        %v1198 = vcvt.s32.f32 %v1182
        %v1199 = vcvt.s32.f32 %v1183
        %v1200 = vcvt.s32.f32 %v1184
        %v1201 = vcvt.s32.f32 %v1185
        %v1202 = vcvt.s32.f32 %v1186
        %v1203 = vcvt.s32.f32 %v1187
        %v1204 = vpack.c.bf16 %v1189, %v1188
        %v1205 = vpack.c.bf16 %v1191, %v1190
        %v1206 = vpack.c.bf16 %v1193, %v1192
        %v1207 = vpack.c.bf16 %v1195, %v1194
        %v1208 = vpack.c.bf16 %v1197, %v1196
        %v1209 = vpack.c.bf16 %v1199, %v1198
        %v1210 = vpack.c.bf16 %v1201, %v1200
        %v1211 = vpack.c.bf16 %v1203, %v1202
        %v1212 = vsub.bf16 %v1164, %v1204
        %v1213 = vsub.bf16 %v1165, %v1205
        %v1214 = vsub.bf16 %v1166, %v1206
        %v1215 = vsub.bf16 %v1167, %v1207
        %v1216 = vsub.bf16 %v1168, %v1208
        %v1217 = vsub.bf16 %v1169, %v1209
        %v1218 = vsub.bf16 %v1170, %v1210
        %v1219 = vsub.bf16 %v1171, %v1211
        %1220 = vmatprep.subr.bf16.mxu0 0
        %1221 = vmatpush1.bf16.msra.mxu0 %v1212
        %1222 = vmatprep.subr.bf16.mxu0 0
        %1223 = vmatpush1.bf16.msra.mxu0 %v1213
        %1224 = vmatprep.subr.bf16.mxu0 0
        %1225 = vmatpush1.bf16.msra.mxu0 %v1214
        %1226 = vmatprep.subr.bf16.mxu0 0
        %1227 = vmatpush1.bf16.msra.mxu0 %v1215
        %1228 = vmatprep.subr.bf16.mxu0 0
        %1229 = vmatpush1.bf16.msra.mxu0 %v1216
        %1230 = vmatprep.subr.bf16.mxu0 0
        %1231 = vmatpush1.bf16.msra.mxu0 %v1217
        %1232 = vmatprep.subr.bf16.mxu0 0
        %1233 = vmatpush1.bf16.msra.mxu0 %v1218
        %1234 = vmatprep.subr.bf16.mxu0 0
        %1235 = vmatpush1.bf16.msra.mxu0 %v1219
        %1236 = vmatprep.subr.bf16.mxu0 0
        %1237 = vmatpush1.bf16.msra.mxu0 0
        %1238 = vmatprep.subr.bf16.mxu0 0
        %1239 = vmatpush1.bf16.msra.mxu0 0
        %1240 = vmatprep.subr.bf16.mxu0 0
        %1241 = vmatpush1.bf16.msra.mxu0 0
        %1242 = vmatprep.subr.bf16.mxu0 0
        %1243 = vmatpush1.bf16.msra.mxu0 0
        %1244 = vmatprep.subr.bf16.mxu0 0
        %1245 = vmatpush1.bf16.msra.mxu0 0
        %1246 = vmatprep.subr.bf16.mxu0 0
        %1247 = vmatpush1.bf16.msra.mxu0 0
        %1248 = vmatprep.subr.bf16.mxu0 0
        %1249 = vmatpush1.bf16.msra.mxu0 0
        %1250 = vmatprep.subr.bf16.mxu0 0
        %1251 = vmatpush1.bf16.msra.mxu0 0
        %1252 = vmatprep.mubr.bf16.mxu0 0
        %1253 = vmatmul.mubr.bf16.gmra.mrb[0].mxu0 %v398
        %v1254 = vpop.f32.mrb[0].mxu0
        %v1255 = vadd.f32 0.0, %v1254
        %v1256 = vpop.f32.mrb[0].mxu0
        %v1257 = vpop.f32.mrb[0].mxu0
        %v1258 = vpop.f32.mrb[0].mxu0
        %1259 = vdwg.mxu0
        %v1260 = vmax.f32 %v1091, %v1255
        %v1261 = vlaneseq
        %v1262 = vshrl.u32 %v1261, 7
        %v1263 = vsub.s32 5, %v1262
        %v1264 = vrot.slane %v399, %v1263
        %vm1265 = vcmp.eq.s32.totalorder %v401, %v1264
        %vm1266 = vcmp.eq.s32.totalorder %v402, %v1264
        %vm1267 = vcmp.eq.s32.totalorder %v403, %v1264
        %vm1268 = vcmp.eq.s32.totalorder %v404, %v1264
        %vm1269 = vcmp.eq.s32.totalorder %v405, %v1264
        %vm1270 = vcmp.eq.s32.totalorder %v406, %v1264
        %vm1271 = vcmp.eq.s32.totalorder %v407, %v1264
        %vm1272 = vcmp.eq.s32.totalorder %v408, %v1264
        %vm1273 = vcmp.eq.s32.totalorder %v409, %v1264
        %vm1274 = vcmp.eq.s32.totalorder %v410, %v1264
        %vm1275 = vcmp.eq.s32.totalorder %v411, %v1264
        %vm1276 = vcmp.eq.s32.totalorder %v412, %v1264
        %vm1277 = vcmp.eq.s32.totalorder %v413, %v1264
        %vm1278 = vcmp.eq.s32.totalorder %v414, %v1264
        %vm1279 = vcmp.eq.s32.totalorder %v415, %v1264
        %vm1280 = vcmp.eq.s32.totalorder %v416, %v1264
        %v1281 = vlaneseq
        %v1282 = vshrl.u32 %v1281, 7
        %v1283 = vsub.s32 5, %v1282
        %v1284 = vrot.slane %v397, %v1283
        %vm1285 = vcmp.eq.s32.totalorder %v401, %v1284
        %vm1286 = vcmp.eq.s32.totalorder %v402, %v1284
        %vm1287 = vcmp.eq.s32.totalorder %v403, %v1284
        %vm1288 = vcmp.eq.s32.totalorder %v404, %v1284
        %vm1289 = vcmp.eq.s32.totalorder %v405, %v1284
        %vm1290 = vcmp.eq.s32.totalorder %v406, %v1284
        %vm1291 = vcmp.eq.s32.totalorder %v407, %v1284
        %vm1292 = vcmp.eq.s32.totalorder %v408, %v1284
        %vm1293 = vcmp.eq.s32.totalorder %v409, %v1284
        %vm1294 = vcmp.eq.s32.totalorder %v410, %v1284
        %vm1295 = vcmp.eq.s32.totalorder %v411, %v1284
        %vm1296 = vcmp.eq.s32.totalorder %v412, %v1284
        %vm1297 = vcmp.eq.s32.totalorder %v413, %v1284
        %vm1298 = vcmp.eq.s32.totalorder %v414, %v1284
        %vm1299 = vcmp.eq.s32.totalorder %v415, %v1284
        %vm1300 = vcmp.eq.s32.totalorder %v416, %v1284
        %v1301 = vsel %vm1265, 1, 0
        %v1302 = vsel %vm1266, 1, 0
        %v1303 = vsel %vm1267, 1, 0
        %v1304 = vsel %vm1268, 1, 0
        %v1305 = vsel %vm1269, 1, 0
        %v1306 = vsel %vm1270, 1, 0
        %v1307 = vsel %vm1271, 1, 0
        %v1308 = vsel %vm1272, 1, 0
        %v1309 = vsel %vm1273, 1, 0
        %v1310 = vsel %vm1274, 1, 0
        %v1311 = vsel %vm1275, 1, 0
        %v1312 = vsel %vm1276, 1, 0
        %v1313 = vsel %vm1277, 1, 0
        %v1314 = vsel %vm1278, 1, 0
        %v1315 = vsel %vm1279, 1, 0
        %v1316 = vsel %vm1280, 1, 0
        %v1317 = vcvt.s32.f32 %v1301
        %v1318 = vcvt.s32.f32 %v1302
        %v1319 = vcvt.s32.f32 %v1303
        %v1320 = vcvt.s32.f32 %v1304
        %v1321 = vcvt.s32.f32 %v1305
        %v1322 = vcvt.s32.f32 %v1306
        %v1323 = vcvt.s32.f32 %v1307
        %v1324 = vcvt.s32.f32 %v1308
        %v1325 = vcvt.s32.f32 %v1309
        %v1326 = vcvt.s32.f32 %v1310
        %v1327 = vcvt.s32.f32 %v1311
        %v1328 = vcvt.s32.f32 %v1312
        %v1329 = vcvt.s32.f32 %v1313
        %v1330 = vcvt.s32.f32 %v1314
        %v1331 = vcvt.s32.f32 %v1315
        %v1332 = vcvt.s32.f32 %v1316
        %v1333 = vpack.c.bf16 %v1318, %v1317
        %v1334 = vpack.c.bf16 %v1320, %v1319
        %v1335 = vpack.c.bf16 %v1322, %v1321
        %v1336 = vpack.c.bf16 %v1324, %v1323
        %v1337 = vpack.c.bf16 %v1326, %v1325
        %v1338 = vpack.c.bf16 %v1328, %v1327
        %v1339 = vpack.c.bf16 %v1330, %v1329
        %v1340 = vpack.c.bf16 %v1332, %v1331
        %v1341 = vsel %vm1285, 1, 0
        %v1342 = vsel %vm1286, 1, 0
        %v1343 = vsel %vm1287, 1, 0
        %v1344 = vsel %vm1288, 1, 0
        %v1345 = vsel %vm1289, 1, 0
        %v1346 = vsel %vm1290, 1, 0
        %v1347 = vsel %vm1291, 1, 0
        %v1348 = vsel %vm1292, 1, 0
        %v1349 = vsel %vm1293, 1, 0
        %v1350 = vsel %vm1294, 1, 0
        %v1351 = vsel %vm1295, 1, 0
        %v1352 = vsel %vm1296, 1, 0
        %v1353 = vsel %vm1297, 1, 0
        %v1354 = vsel %vm1298, 1, 0
        %v1355 = vsel %vm1299, 1, 0
        %v1356 = vsel %vm1300, 1, 0
        %v1357 = vcvt.s32.f32 %v1341
        %v1358 = vcvt.s32.f32 %v1342
        %v1359 = vcvt.s32.f32 %v1343
        %v1360 = vcvt.s32.f32 %v1344
        %v1361 = vcvt.s32.f32 %v1345
        %v1362 = vcvt.s32.f32 %v1346
        %v1363 = vcvt.s32.f32 %v1347
        %v1364 = vcvt.s32.f32 %v1348
        %v1365 = vcvt.s32.f32 %v1349
        %v1366 = vcvt.s32.f32 %v1350
        %v1367 = vcvt.s32.f32 %v1351
        %v1368 = vcvt.s32.f32 %v1352
        %v1369 = vcvt.s32.f32 %v1353
        %v1370 = vcvt.s32.f32 %v1354
        %v1371 = vcvt.s32.f32 %v1355
        %v1372 = vcvt.s32.f32 %v1356
        %v1373 = vpack.c.bf16 %v1358, %v1357
        %v1374 = vpack.c.bf16 %v1360, %v1359
        %v1375 = vpack.c.bf16 %v1362, %v1361
        %v1376 = vpack.c.bf16 %v1364, %v1363
        %v1377 = vpack.c.bf16 %v1366, %v1365
        %v1378 = vpack.c.bf16 %v1368, %v1367
        %v1379 = vpack.c.bf16 %v1370, %v1369
        %v1380 = vpack.c.bf16 %v1372, %v1371
        %v1381 = vsub.bf16 %v1333, %v1373
        %v1382 = vsub.bf16 %v1334, %v1374
        %v1383 = vsub.bf16 %v1335, %v1375
        %v1384 = vsub.bf16 %v1336, %v1376
        %v1385 = vsub.bf16 %v1337, %v1377
        %v1386 = vsub.bf16 %v1338, %v1378
        %v1387 = vsub.bf16 %v1339, %v1379
        %v1388 = vsub.bf16 %v1340, %v1380
        %1389 = vmatprep.subr.bf16.mxu0 0
        %1390 = vmatpush1.bf16.msra.mxu0 %v1381
        %1391 = vmatprep.subr.bf16.mxu0 0
        %1392 = vmatpush1.bf16.msra.mxu0 %v1382
        %1393 = vmatprep.subr.bf16.mxu0 0
        %1394 = vmatpush1.bf16.msra.mxu0 %v1383
        %1395 = vmatprep.subr.bf16.mxu0 0
        %1396 = vmatpush1.bf16.msra.mxu0 %v1384
        %1397 = vmatprep.subr.bf16.mxu0 0
        %1398 = vmatpush1.bf16.msra.mxu0 %v1385
        %1399 = vmatprep.subr.bf16.mxu0 0
        %1400 = vmatpush1.bf16.msra.mxu0 %v1386
        %1401 = vmatprep.subr.bf16.mxu0 0
        %1402 = vmatpush1.bf16.msra.mxu0 %v1387
        %1403 = vmatprep.subr.bf16.mxu0 0
        %1404 = vmatpush1.bf16.msra.mxu0 %v1388
        %1405 = vmatprep.subr.bf16.mxu0 0
        %1406 = vmatpush1.bf16.msra.mxu0 0
        %1407 = vmatprep.subr.bf16.mxu0 0
        %1408 = vmatpush1.bf16.msra.mxu0 0
        %1409 = vmatprep.subr.bf16.mxu0 0
        %1410 = vmatpush1.bf16.msra.mxu0 0
        %1411 = vmatprep.subr.bf16.mxu0 0
        %1412 = vmatpush1.bf16.msra.mxu0 0
        %1413 = vmatprep.subr.bf16.mxu0 0
        %1414 = vmatpush1.bf16.msra.mxu0 0
        %1415 = vmatprep.subr.bf16.mxu0 0
        %1416 = vmatpush1.bf16.msra.mxu0 0
        %1417 = vmatprep.subr.bf16.mxu0 0
        %1418 = vmatpush1.bf16.msra.mxu0 0
        %1419 = vmatprep.subr.bf16.mxu0 0
        %1420 = vmatpush1.bf16.msra.mxu0 0
        %1421 = vmatprep.mubr.bf16.mxu0 0
        %1422 = vmatmul.mubr.bf16.gmra.mrb[0].mxu0 %v398
        %v1423 = vpop.f32.mrb[0].mxu0
        %v1424 = vadd.f32 0.0, %v1423
        %v1425 = vpop.f32.mrb[0].mxu0
        %v1426 = vpop.f32.mrb[0].mxu0
        %v1427 = vpop.f32.mrb[0].mxu0
        %1428 = vdwg.mxu0
        %v1429 = vmax.f32 %v1260, %v1424
        %v1430 = vlaneseq
        %v1431 = vshrl.u32 %v1430, 7
        %v1432 = vsub.s32 6, %v1431
        %v1433 = vrot.slane %v399, %v1432
        %vm1434 = vcmp.eq.s32.totalorder %v401, %v1433
        %vm1435 = vcmp.eq.s32.totalorder %v402, %v1433
        %vm1436 = vcmp.eq.s32.totalorder %v403, %v1433
        %vm1437 = vcmp.eq.s32.totalorder %v404, %v1433
        %vm1438 = vcmp.eq.s32.totalorder %v405, %v1433
        %vm1439 = vcmp.eq.s32.totalorder %v406, %v1433
        %vm1440 = vcmp.eq.s32.totalorder %v407, %v1433
        %vm1441 = vcmp.eq.s32.totalorder %v408, %v1433
        %vm1442 = vcmp.eq.s32.totalorder %v409, %v1433
        %vm1443 = vcmp.eq.s32.totalorder %v410, %v1433
        %vm1444 = vcmp.eq.s32.totalorder %v411, %v1433
        %vm1445 = vcmp.eq.s32.totalorder %v412, %v1433
        %vm1446 = vcmp.eq.s32.totalorder %v413, %v1433
        %vm1447 = vcmp.eq.s32.totalorder %v414, %v1433
        %vm1448 = vcmp.eq.s32.totalorder %v415, %v1433
        %vm1449 = vcmp.eq.s32.totalorder %v416, %v1433
        %v1450 = vlaneseq
        %v1451 = vshrl.u32 %v1450, 7
        %v1452 = vsub.s32 6, %v1451
        %v1453 = vrot.slane %v397, %v1452
        %vm1454 = vcmp.eq.s32.totalorder %v401, %v1453
        %vm1455 = vcmp.eq.s32.totalorder %v402, %v1453
        %vm1456 = vcmp.eq.s32.totalorder %v403, %v1453
        %vm1457 = vcmp.eq.s32.totalorder %v404, %v1453
        %vm1458 = vcmp.eq.s32.totalorder %v405, %v1453
        %vm1459 = vcmp.eq.s32.totalorder %v406, %v1453
        %vm1460 = vcmp.eq.s32.totalorder %v407, %v1453
        %vm1461 = vcmp.eq.s32.totalorder %v408, %v1453
        %vm1462 = vcmp.eq.s32.totalorder %v409, %v1453
        %vm1463 = vcmp.eq.s32.totalorder %v410, %v1453
        %vm1464 = vcmp.eq.s32.totalorder %v411, %v1453
        %vm1465 = vcmp.eq.s32.totalorder %v412, %v1453
        %vm1466 = vcmp.eq.s32.totalorder %v413, %v1453
        %vm1467 = vcmp.eq.s32.totalorder %v414, %v1453
        %vm1468 = vcmp.eq.s32.totalorder %v415, %v1453
        %vm1469 = vcmp.eq.s32.totalorder %v416, %v1453
        %v1470 = vsel %vm1434, 1, 0
        %v1471 = vsel %vm1435, 1, 0
        %v1472 = vsel %vm1436, 1, 0
        %v1473 = vsel %vm1437, 1, 0
        %v1474 = vsel %vm1438, 1, 0
        %v1475 = vsel %vm1439, 1, 0
        %v1476 = vsel %vm1440, 1, 0
        %v1477 = vsel %vm1441, 1, 0
        %v1478 = vsel %vm1442, 1, 0
        %v1479 = vsel %vm1443, 1, 0
        %v1480 = vsel %vm1444, 1, 0
        %v1481 = vsel %vm1445, 1, 0
        %v1482 = vsel %vm1446, 1, 0
        %v1483 = vsel %vm1447, 1, 0
        %v1484 = vsel %vm1448, 1, 0
        %v1485 = vsel %vm1449, 1, 0
        %v1486 = vcvt.s32.f32 %v1470
        %v1487 = vcvt.s32.f32 %v1471
        %v1488 = vcvt.s32.f32 %v1472
        %v1489 = vcvt.s32.f32 %v1473
        %v1490 = vcvt.s32.f32 %v1474
        %v1491 = vcvt.s32.f32 %v1475
        %v1492 = vcvt.s32.f32 %v1476
        %v1493 = vcvt.s32.f32 %v1477
        %v1494 = vcvt.s32.f32 %v1478
        %v1495 = vcvt.s32.f32 %v1479
        %v1496 = vcvt.s32.f32 %v1480
        %v1497 = vcvt.s32.f32 %v1481
        %v1498 = vcvt.s32.f32 %v1482
        %v1499 = vcvt.s32.f32 %v1483
        %v1500 = vcvt.s32.f32 %v1484
        %v1501 = vcvt.s32.f32 %v1485
        %v1502 = vpack.c.bf16 %v1487, %v1486
        %v1503 = vpack.c.bf16 %v1489, %v1488
        %v1504 = vpack.c.bf16 %v1491, %v1490
        %v1505 = vpack.c.bf16 %v1493, %v1492
        %v1506 = vpack.c.bf16 %v1495, %v1494
        %v1507 = vpack.c.bf16 %v1497, %v1496
        %v1508 = vpack.c.bf16 %v1499, %v1498
        %v1509 = vpack.c.bf16 %v1501, %v1500
        %v1510 = vsel %vm1454, 1, 0
        %v1511 = vsel %vm1455, 1, 0
        %v1512 = vsel %vm1456, 1, 0
        %v1513 = vsel %vm1457, 1, 0
        %v1514 = vsel %vm1458, 1, 0
        %v1515 = vsel %vm1459, 1, 0
        %v1516 = vsel %vm1460, 1, 0
        %v1517 = vsel %vm1461, 1, 0
        %v1518 = vsel %vm1462, 1, 0
        %v1519 = vsel %vm1463, 1, 0
        %v1520 = vsel %vm1464, 1, 0
        %v1521 = vsel %vm1465, 1, 0
        %v1522 = vsel %vm1466, 1, 0
        %v1523 = vsel %vm1467, 1, 0
        %v1524 = vsel %vm1468, 1, 0
        %v1525 = vsel %vm1469, 1, 0
        %v1526 = vcvt.s32.f32 %v1510
        %v1527 = vcvt.s32.f32 %v1511
        %v1528 = vcvt.s32.f32 %v1512
        %v1529 = vcvt.s32.f32 %v1513
        %v1530 = vcvt.s32.f32 %v1514
        %v1531 = vcvt.s32.f32 %v1515
        %v1532 = vcvt.s32.f32 %v1516
        %v1533 = vcvt.s32.f32 %v1517
        %v1534 = vcvt.s32.f32 %v1518
        %v1535 = vcvt.s32.f32 %v1519
        %v1536 = vcvt.s32.f32 %v1520
        %v1537 = vcvt.s32.f32 %v1521
        %v1538 = vcvt.s32.f32 %v1522
        %v1539 = vcvt.s32.f32 %v1523
        %v1540 = vcvt.s32.f32 %v1524
        %v1541 = vcvt.s32.f32 %v1525
        %v1542 = vpack.c.bf16 %v1527, %v1526
        %v1543 = vpack.c.bf16 %v1529, %v1528
        %v1544 = vpack.c.bf16 %v1531, %v1530
        %v1545 = vpack.c.bf16 %v1533, %v1532
        %v1546 = vpack.c.bf16 %v1535, %v1534
        %v1547 = vpack.c.bf16 %v1537, %v1536
        %v1548 = vpack.c.bf16 %v1539, %v1538
        %v1549 = vpack.c.bf16 %v1541, %v1540
        %v1550 = vsub.bf16 %v1502, %v1542
        %v1551 = vsub.bf16 %v1503, %v1543
        %v1552 = vsub.bf16 %v1504, %v1544
        %v1553 = vsub.bf16 %v1505, %v1545
        %v1554 = vsub.bf16 %v1506, %v1546
        %v1555 = vsub.bf16 %v1507, %v1547
        %v1556 = vsub.bf16 %v1508, %v1548
        %v1557 = vsub.bf16 %v1509, %v1549
        %1558 = vmatprep.subr.bf16.mxu0 0
        %1559 = vmatpush1.bf16.msra.mxu0 %v1550
        %1560 = vmatprep.subr.bf16.mxu0 0
        %1561 = vmatpush1.bf16.msra.mxu0 %v1551
        %1562 = vmatprep.subr.bf16.mxu0 0
        %1563 = vmatpush1.bf16.msra.mxu0 %v1552
        %1564 = vmatprep.subr.bf16.mxu0 0
        %1565 = vmatpush1.bf16.msra.mxu0 %v1553
        %1566 = vmatprep.subr.bf16.mxu0 0
        %1567 = vmatpush1.bf16.msra.mxu0 %v1554
        %1568 = vmatprep.subr.bf16.mxu0 0
        %1569 = vmatpush1.bf16.msra.mxu0 %v1555
        %1570 = vmatprep.subr.bf16.mxu0 0
        %1571 = vmatpush1.bf16.msra.mxu0 %v1556
        %1572 = vmatprep.subr.bf16.mxu0 0
        %1573 = vmatpush1.bf16.msra.mxu0 %v1557
        %1574 = vmatprep.subr.bf16.mxu0 0
        %1575 = vmatpush1.bf16.msra.mxu0 0
        %1576 = vmatprep.subr.bf16.mxu0 0
        %1577 = vmatpush1.bf16.msra.mxu0 0
        %1578 = vmatprep.subr.bf16.mxu0 0
        %1579 = vmatpush1.bf16.msra.mxu0 0
        %1580 = vmatprep.subr.bf16.mxu0 0
        %1581 = vmatpush1.bf16.msra.mxu0 0
        %1582 = vmatprep.subr.bf16.mxu0 0
        %1583 = vmatpush1.bf16.msra.mxu0 0
        %1584 = vmatprep.subr.bf16.mxu0 0
        %1585 = vmatpush1.bf16.msra.mxu0 0
        %1586 = vmatprep.subr.bf16.mxu0 0
        %1587 = vmatpush1.bf16.msra.mxu0 0
        %1588 = vmatprep.subr.bf16.mxu0 0
        %1589 = vmatpush1.bf16.msra.mxu0 0
        %1590 = vmatprep.mubr.bf16.mxu0 0
        %1591 = vmatmul.mubr.bf16.gmra.mrb[0].mxu0 %v398
        %v1592 = vpop.f32.mrb[0].mxu0
        %v1593 = vadd.f32 0.0, %v1592
        %v1594 = vpop.f32.mrb[0].mxu0
        %v1595 = vpop.f32.mrb[0].mxu0
        %v1596 = vpop.f32.mrb[0].mxu0
        %1597 = vdwg.mxu0
        %v1598 = vmax.f32 %v1429, %v1593
        %v1599 = vlaneseq
        %v1600 = vshrl.u32 %v1599, 7
        %v1601 = vsub.s32 7, %v1600
        %v1602 = vrot.slane %v399, %v1601
        %vm1603 = vcmp.eq.s32.totalorder %v401, %v1602
        %vm1604 = vcmp.eq.s32.totalorder %v402, %v1602
        %vm1605 = vcmp.eq.s32.totalorder %v403, %v1602
        %vm1606 = vcmp.eq.s32.totalorder %v404, %v1602
        %vm1607 = vcmp.eq.s32.totalorder %v405, %v1602
        %vm1608 = vcmp.eq.s32.totalorder %v406, %v1602
        %vm1609 = vcmp.eq.s32.totalorder %v407, %v1602
        %vm1610 = vcmp.eq.s32.totalorder %v408, %v1602
        %vm1611 = vcmp.eq.s32.totalorder %v409, %v1602
        %vm1612 = vcmp.eq.s32.totalorder %v410, %v1602
        %vm1613 = vcmp.eq.s32.totalorder %v411, %v1602
        %vm1614 = vcmp.eq.s32.totalorder %v412, %v1602
        %vm1615 = vcmp.eq.s32.totalorder %v413, %v1602
        %vm1616 = vcmp.eq.s32.totalorder %v414, %v1602
        %vm1617 = vcmp.eq.s32.totalorder %v415, %v1602
        %vm1618 = vcmp.eq.s32.totalorder %v416, %v1602
        %v1619 = vlaneseq
        %v1620 = vshrl.u32 %v1619, 7
        %v1621 = vsub.s32 7, %v1620
        %v1622 = vrot.slane %v397, %v1621
        %vm1623 = vcmp.eq.s32.totalorder %v401, %v1622
        %vm1624 = vcmp.eq.s32.totalorder %v402, %v1622
        %vm1625 = vcmp.eq.s32.totalorder %v403, %v1622
        %vm1626 = vcmp.eq.s32.totalorder %v404, %v1622
        %vm1627 = vcmp.eq.s32.totalorder %v405, %v1622
        %vm1628 = vcmp.eq.s32.totalorder %v406, %v1622
        %vm1629 = vcmp.eq.s32.totalorder %v407, %v1622
        %vm1630 = vcmp.eq.s32.totalorder %v408, %v1622
        %vm1631 = vcmp.eq.s32.totalorder %v409, %v1622
        %vm1632 = vcmp.eq.s32.totalorder %v410, %v1622
        %vm1633 = vcmp.eq.s32.totalorder %v411, %v1622
        %vm1634 = vcmp.eq.s32.totalorder %v412, %v1622
        %vm1635 = vcmp.eq.s32.totalorder %v413, %v1622
        %vm1636 = vcmp.eq.s32.totalorder %v414, %v1622
        %vm1637 = vcmp.eq.s32.totalorder %v415, %v1622
        %vm1638 = vcmp.eq.s32.totalorder %v416, %v1622
        %v1639 = vsel %vm1603, 1, 0
        %v1640 = vsel %vm1604, 1, 0
        %v1641 = vsel %vm1605, 1, 0
        %v1642 = vsel %vm1606, 1, 0
        %v1643 = vsel %vm1607, 1, 0
        %v1644 = vsel %vm1608, 1, 0
        %v1645 = vsel %vm1609, 1, 0
        %v1646 = vsel %vm1610, 1, 0
        %v1647 = vsel %vm1611, 1, 0
        %v1648 = vsel %vm1612, 1, 0
        %v1649 = vsel %vm1613, 1, 0
        %v1650 = vsel %vm1614, 1, 0
        %v1651 = vsel %vm1615, 1, 0
        %v1652 = vsel %vm1616, 1, 0
        %v1653 = vsel %vm1617, 1, 0
        %v1654 = vsel %vm1618, 1, 0
        %v1655 = vcvt.s32.f32 %v1639
        %v1656 = vcvt.s32.f32 %v1640
        %v1657 = vcvt.s32.f32 %v1641
        %v1658 = vcvt.s32.f32 %v1642
        %v1659 = vcvt.s32.f32 %v1643
        %v1660 = vcvt.s32.f32 %v1644
        %v1661 = vcvt.s32.f32 %v1645
        %v1662 = vcvt.s32.f32 %v1646
        %v1663 = vcvt.s32.f32 %v1647
        %v1664 = vcvt.s32.f32 %v1648
        %v1665 = vcvt.s32.f32 %v1649
        %v1666 = vcvt.s32.f32 %v1650
        %v1667 = vcvt.s32.f32 %v1651
        %v1668 = vcvt.s32.f32 %v1652
        %v1669 = vcvt.s32.f32 %v1653
        %v1670 = vcvt.s32.f32 %v1654
        %v1671 = vpack.c.bf16 %v1656, %v1655
        %v1672 = vpack.c.bf16 %v1658, %v1657
        %v1673 = vpack.c.bf16 %v1660, %v1659
        %v1674 = vpack.c.bf16 %v1662, %v1661
        %v1675 = vpack.c.bf16 %v1664, %v1663
        %v1676 = vpack.c.bf16 %v1666, %v1665
        %v1677 = vpack.c.bf16 %v1668, %v1667
        %v1678 = vpack.c.bf16 %v1670, %v1669
        %v1679 = vsel %vm1623, 1, 0
        %v1680 = vsel %vm1624, 1, 0
        %v1681 = vsel %vm1625, 1, 0
        %v1682 = vsel %vm1626, 1, 0
        %v1683 = vsel %vm1627, 1, 0
        %v1684 = vsel %vm1628, 1, 0
        %v1685 = vsel %vm1629, 1, 0
        %v1686 = vsel %vm1630, 1, 0
        %v1687 = vsel %vm1631, 1, 0
        %v1688 = vsel %vm1632, 1, 0
        %v1689 = vsel %vm1633, 1, 0
        %v1690 = vsel %vm1634, 1, 0
        %v1691 = vsel %vm1635, 1, 0
        %v1692 = vsel %vm1636, 1, 0
        %v1693 = vsel %vm1637, 1, 0
        %v1694 = vsel %vm1638, 1, 0
        %v1695 = vcvt.s32.f32 %v1679
        %v1696 = vcvt.s32.f32 %v1680
        %v1697 = vcvt.s32.f32 %v1681
        %v1698 = vcvt.s32.f32 %v1682
        %v1699 = vcvt.s32.f32 %v1683
        %v1700 = vcvt.s32.f32 %v1684
        %v1701 = vcvt.s32.f32 %v1685
        %v1702 = vcvt.s32.f32 %v1686
        %v1703 = vcvt.s32.f32 %v1687
        %v1704 = vcvt.s32.f32 %v1688
        %v1705 = vcvt.s32.f32 %v1689
        %v1706 = vcvt.s32.f32 %v1690
        %v1707 = vcvt.s32.f32 %v1691
        %v1708 = vcvt.s32.f32 %v1692
        %v1709 = vcvt.s32.f32 %v1693
        %v1710 = vcvt.s32.f32 %v1694
        %v1711 = vpack.c.bf16 %v1696, %v1695
        %v1712 = vpack.c.bf16 %v1698, %v1697
        %v1713 = vpack.c.bf16 %v1700, %v1699
        %v1714 = vpack.c.bf16 %v1702, %v1701
        %v1715 = vpack.c.bf16 %v1704, %v1703
        %v1716 = vpack.c.bf16 %v1706, %v1705
        %v1717 = vpack.c.bf16 %v1708, %v1707
        %v1718 = vpack.c.bf16 %v1710, %v1709
        %v1719 = vsub.bf16 %v1671, %v1711
        %v1720 = vsub.bf16 %v1672, %v1712
        %v1721 = vsub.bf16 %v1673, %v1713
        %v1722 = vsub.bf16 %v1674, %v1714
        %v1723 = vsub.bf16 %v1675, %v1715
        %v1724 = vsub.bf16 %v1676, %v1716
        %v1725 = vsub.bf16 %v1677, %v1717
        %v1726 = vsub.bf16 %v1678, %v1718
        %1727 = vmatprep.subr.bf16.mxu0 0
        %1728 = vmatpush1.bf16.msra.mxu0 %v1719
        %1729 = vmatprep.subr.bf16.mxu0 0
        %1730 = vmatpush1.bf16.msra.mxu0 %v1720
        %1731 = vmatprep.subr.bf16.mxu0 0
        %1732 = vmatpush1.bf16.msra.mxu0 %v1721
        %1733 = vmatprep.subr.bf16.mxu0 0
        %1734 = vmatpush1.bf16.msra.mxu0 %v1722
        %1735 = vmatprep.subr.bf16.mxu0 0
        %1736 = vmatpush1.bf16.msra.mxu0 %v1723
        %1737 = vmatprep.subr.bf16.mxu0 0
        %1738 = vmatpush1.bf16.msra.mxu0 %v1724
        %1739 = vmatprep.subr.bf16.mxu0 0
        %1740 = vmatpush1.bf16.msra.mxu0 %v1725
        %1741 = vmatprep.subr.bf16.mxu0 0
        %1742 = vmatpush1.bf16.msra.mxu0 %v1726
        %1743 = vmatprep.subr.bf16.mxu0 0
        %1744 = vmatpush1.bf16.msra.mxu0 0
        %1745 = vmatprep.subr.bf16.mxu0 0
        %1746 = vmatpush1.bf16.msra.mxu0 0
        %1747 = vmatprep.subr.bf16.mxu0 0
        %1748 = vmatpush1.bf16.msra.mxu0 0
        %1749 = vmatprep.subr.bf16.mxu0 0
        %1750 = vmatpush1.bf16.msra.mxu0 0
        %1751 = vmatprep.subr.bf16.mxu0 0
        %1752 = vmatpush1.bf16.msra.mxu0 0
        %1753 = vmatprep.subr.bf16.mxu0 0
        %1754 = vmatpush1.bf16.msra.mxu0 0
        %1755 = vmatprep.subr.bf16.mxu0 0
        %1756 = vmatpush1.bf16.msra.mxu0 0
        %1757 = vmatprep.subr.bf16.mxu0 0
        %1758 = vmatpush1.bf16.msra.mxu0 0
        %1759 = vmatprep.mubr.bf16.mxu0 0
        %1760 = vmatmul.mubr.bf16.gmra.mrb[0].mxu0 %v398
        %v1761 = vpop.f32.mrb[0].mxu0
        %v1762 = vadd.f32 0.0, %v1761
        %v1763 = vpop.f32.mrb[0].mxu0
        %v1764 = vpop.f32.mrb[0].mxu0
        %v1765 = vpop.f32.mrb[0].mxu0
        %1766 = vdwg.mxu0
        %v1767 = vmax.f32 %v1598, %v1762
        %v1768 = vunpack.c.l.bf16 %v398
        %v1769 = vld [vmem:[#allocation8] sm:$0xff]
        %v1770 = vld [vmem:[#allocation10] sm:$0xff]
        %vm1771 = vcmask 31744
        %v1773 = vsel %vm1771, %v1770, 0
        %vm1775 = vcmask 1043456
        %v1777 = vsel %vm1775, %v1767, 0
        %1779 = vmatprep.subr.mxu0 0.0
        %1780 = vmatpush1.msra.mxu0 %v1777
        %1781 = vmatprep.subr.mxu0 0.0
        %1782 = vmatpush1.msra.mxu0 0.0
        %1783 = vmatprep.subr.mxu0 0.0
        %1784 = vmatpush1.msra.mxu0 0.0
        %1785 = vmatprep.subr.mxu0 0.0
        %1786 = vmatpush1.msra.mxu0 0.0
        %1787 = vmatprep.subr.mxu0 0.0
        %1788 = vmatpush1.msra.mxu0 0.0
        %1789 = vmatprep.subr.mxu0 0.0
        %1790 = vmatpush1.msra.mxu0 0.0
        %1791 = vmatprep.subr.mxu0 0.0
        %1792 = vmatpush1.msra.mxu0 0.0
        %1793 = vmatprep.subr.mxu0 0.0
        %1794 = vmatpush1.msra.mxu0 0.0
        %1795 = vmatprep.subr.mxu0 0.0
        %1796 = vmatpush1.msra.mxu0 0.0
        %1797 = vmatprep.subr.mxu0 0.0
        %1798 = vmatpush1.msra.mxu0 0.0
        %1799 = vmatprep.subr.mxu0 0.0
        %1800 = vmatpush1.msra.mxu0 0.0
        %1801 = vmatprep.subr.mxu0 0.0
        %1802 = vmatpush1.msra.mxu0 0.0
        %1803 = vmatprep.subr.mxu0 0.0
        %1804 = vmatpush1.msra.mxu0 0.0
        %1805 = vmatprep.subr.mxu0 0.0
        %1806 = vmatpush1.msra.mxu0 0.0
        %1807 = vmatprep.subr.mxu0 0.0
        %1808 = vmatpush1.msra.mxu0 0.0
        %1809 = vmatprep.subr.mxu0 0.0
        %1810 = vmatpush1.msra.mxu0 0.0
        %1811 = vmatprep.subr.mxu0 0.0
        %1812 = vmatpush1.msra.mxu0 0.0
        %1813 = vmatprep.subr.mxu0 0.0
        %1814 = vmatpush1.msra.mxu0 0.0
        %1815 = vmatprep.subr.mxu0 0.0
        %1816 = vmatpush1.msra.mxu0 0.0
        %1817 = vmatprep.subr.mxu0 0.0
        %1818 = vmatpush1.msra.mxu0 0.0
        %1819 = vmatprep.subr.mxu0 0.0
        %1820 = vmatpush1.msra.mxu0 0.0
        %1821 = vmatprep.subr.mxu0 0.0
        %1822 = vmatpush1.msra.mxu0 0.0
        %1823 = vmatprep.subr.mxu0 0.0
        %1824 = vmatpush1.msra.mxu0 0.0
        %1825 = vmatprep.subr.mxu0 0.0
        %1826 = vmatpush1.msra.mxu0 0.0
        %1827 = vmatprep.subr.mxu0 0.0
        %1828 = vmatpush1.msra.mxu0 0.0
        %1829 = vmatprep.subr.mxu0 0.0
        %1830 = vmatpush1.msra.mxu0 0.0
        %1831 = vmatprep.subr.mxu0 0.0
        %1832 = vmatpush1.msra.mxu0 0.0
        %1833 = vmatprep.subr.mxu0 0.0
        %1834 = vmatpush1.msra.mxu0 0.0
        %1835 = vmatprep.subr.mxu0 0.0
        %1836 = vmatpush1.msra.mxu0 0.0
        %1837 = vmatprep.subr.mxu0 0.0
        %1838 = vmatpush1.msra.mxu0 0.0
        %1839 = vmatprep.subr.mxu0 0.0
        %1840 = vmatpush1.msra.mxu0 0.0
        %1841 = vmatprep.subr.mxu0 0.0
        %1842 = vmatpush1.msra.mxu0 0.0
        %1843 = vmatprep.mubr.f32.mxu0 0.0
        %1844 = vmatmul.mubr.f32.gmra.mrb[0].mxu0 %v1773
        %v1845 = vpop.f32.mrb[0].mxu0
        %v1846 = vadd.f32 0.0, %v1845
        %v1847 = vpop.f32.mrb[0].mxu0
        %1848 = vdwg.mxu0
        %v1850 = vsel %vm1771, %v1769, 0
        %v1853 = vsel %vm1775, %v1768, 0
        %1855 = vmatprep.subr.mxu0 0.0
        %1856 = vmatpush1.msra.mxu0 %v1853
        %1857 = vmatprep.subr.mxu0 0.0
        %1858 = vmatpush1.msra.mxu0 0.0
        %1859 = vmatprep.subr.mxu0 0.0
        %1860 = vmatpush1.msra.mxu0 0.0
        %1861 = vmatprep.subr.mxu0 0.0
        %1862 = vmatpush1.msra.mxu0 0.0
        %1863 = vmatprep.subr.mxu0 0.0
        %1864 = vmatpush1.msra.mxu0 0.0
        %1865 = vmatprep.subr.mxu0 0.0
        %1866 = vmatpush1.msra.mxu0 0.0
        %1867 = vmatprep.subr.mxu0 0.0
        %1868 = vmatpush1.msra.mxu0 0.0
        %1869 = vmatprep.subr.mxu0 0.0
        %1870 = vmatpush1.msra.mxu0 0.0
        %1871 = vmatprep.subr.mxu0 0.0
        %1872 = vmatpush1.msra.mxu0 0.0
        %1873 = vmatprep.subr.mxu0 0.0
        %1874 = vmatpush1.msra.mxu0 0.0
        %1875 = vmatprep.subr.mxu0 0.0
        %1876 = vmatpush1.msra.mxu0 0.0
        %1877 = vmatprep.subr.mxu0 0.0
        %1878 = vmatpush1.msra.mxu0 0.0
        %1879 = vmatprep.subr.mxu0 0.0
        %1880 = vmatpush1.msra.mxu0 0.0
        %1881 = vmatprep.subr.mxu0 0.0
        %1882 = vmatpush1.msra.mxu0 0.0
        %1883 = vmatprep.subr.mxu0 0.0
        %1884 = vmatpush1.msra.mxu0 0.0
        %1885 = vmatprep.subr.mxu0 0.0
        %1886 = vmatpush1.msra.mxu0 0.0
        %1887 = vmatprep.subr.mxu0 0.0
        %1888 = vmatpush1.msra.mxu0 0.0
        %1889 = vmatprep.subr.mxu0 0.0
        %1890 = vmatpush1.msra.mxu0 0.0
        %1891 = vmatprep.subr.mxu0 0.0
        %1892 = vmatpush1.msra.mxu0 0.0
        %1893 = vmatprep.subr.mxu0 0.0
        %1894 = vmatpush1.msra.mxu0 0.0
        %1895 = vmatprep.subr.mxu0 0.0
        %1896 = vmatpush1.msra.mxu0 0.0
        %1897 = vmatprep.subr.mxu0 0.0
        %1898 = vmatpush1.msra.mxu0 0.0
        %1899 = vmatprep.subr.mxu0 0.0
        %1900 = vmatpush1.msra.mxu0 0.0
        %1901 = vmatprep.subr.mxu0 0.0
        %1902 = vmatpush1.msra.mxu0 0.0
        %1903 = vmatprep.subr.mxu0 0.0
        %1904 = vmatpush1.msra.mxu0 0.0
        %1905 = vmatprep.subr.mxu0 0.0
        %1906 = vmatpush1.msra.mxu0 0.0
        %1907 = vmatprep.subr.mxu0 0.0
        %1908 = vmatpush1.msra.mxu0 0.0
        %1909 = vmatprep.subr.mxu0 0.0
        %1910 = vmatpush1.msra.mxu0 0.0
        %1911 = vmatprep.subr.mxu0 0.0
        %1912 = vmatpush1.msra.mxu0 0.0
        %1913 = vmatprep.subr.mxu0 0.0
        %1914 = vmatpush1.msra.mxu0 0.0
        %1915 = vmatprep.subr.mxu0 0.0
        %1916 = vmatpush1.msra.mxu0 0.0
        %1917 = vmatprep.subr.mxu0 0.0
        %1918 = vmatpush1.msra.mxu0 0.0
        %1919 = vmatprep.mubr.f32.mxu0 0.0
        %1920 = vmatmul.mubr.f32.gmra.mrb[0].mxu0 %v1850
        %v1921 = vpop.f32.mrb[0].mxu0
        %v1922 = vadd.f32 %v1846, %v1921
        %v1923 = vpop.f32.mrb[0].mxu0
        %1924 = vdwg.mxu0
        %v1925 = vld [vmem:[#allocation11] sm:$0xff]
        %1927 = vset.pattern.permute.xlu0 0
        %1928 = vperm.xlu0 %1927, %v1925
        %v1929 = vpop.permute.xlu0 %1928
        %v1931 = vadd.f32 %v1922, %v1929
        %v1932 = vmax.f32 %v1931, 0.0
        %1933 = vst [vmem:[%s395] sm:$0xff] %v1932
        %s1934 = sand.u32 %s195, 1
        %s1935 = scalar_lea.sflag [#allocation4], %s1934
        %s1936 = sand.u32 %s195, 1
        %s1937 = smul.addr %s1936, 8
        %s1938 = scalar_lea.vmem [#allocation13], %s1937
        // Predicated region
        $region69: #{tpu_custom_call.1} parent=43 // pred_check
          %p1939 = pneg %p205
        $region70: #{tpu_custom_call.1} parent=43 // pred_check_branch
          %1941 = sbr.rel (%p1939) target = $region72
        $region71: #{tpu_custom_call.1} parent=43 // pred_region
          %s1943 = ssub.s32 128, 128
          %1944 = vsyncadd %s1935, %s1943
          %s1945 = sadd.s32 %s33, %s32
          %s1946 = smul.addr %s1945, 128
          %s1947 = scalar_lea.hbm %s6, %s1946
          %s1949 = sshll.u32 %s1938, 4
          %s1950 = int_to_ptr.vmem [resolvable:$true] %s1949
          %1952 = dma.vmem_to_hbm [thread:$0]  %s1950, 128, %s1947, %s1935
        $region72: #{tpu_custom_call.1} parent=43 // pred_fallthru
          _
      $region44: #{tpu_custom_call.1} parent=5 // pred_fallthru
        _
      %p1953 = scmp.le.s32.totalorder 2, %s23
      // Predicated region
      $region73: #{tpu_custom_call.1} parent=5 // pred_check
        %p1954 = pneg %p1953
      $region74: #{tpu_custom_call.1} parent=5 // pred_check_branch
        %1956 = sbr.rel (%p1954) target = $region76
      $region75: #{tpu_custom_call.1} parent=5 // pred_region
        %s1957 = ssub.s32 %s23, 2
        // Predicated region
        $region77: #{tpu_custom_call.1} parent=75 // pred_check
          %p1958 = pneg %p211
        $region78: #{tpu_custom_call.1} parent=75 // pred_check_branch
          %1960 = sbr.rel (%p1958) target = $region80
        $region79: #{tpu_custom_call.1} parent=75 // pred_region
          %s1961 = sand.u32 %s196, 1
          %s1962 = scalar_lea.sflag [#allocation4], %s1961
          %s1963 = sand.u32 %s196, 1
          %s1964 = smul.addr %s1963, 8
          %s1965 = scalar_lea.vmem [#allocation13], %s1964
          %1966 = dma.done %s1962, 128
        $region80: #{tpu_custom_call.1} parent=75 // pred_fallthru
          _
      $region76: #{tpu_custom_call.1} parent=5 // pred_fallthru
        _
    $region6: #{tpu_custom_call.1} parent=1 // loop_footer
      %s27 = sadd.s32 1, %s23
    $region7: #{tpu_custom_call.1} parent=1 // loop_footer_branch
      %22 = sbr.rel target = $region3
    $region8: #{tpu_custom_call.1} parent=1 // loop_exit
      _
    %1967 = vsyncpa [#allocation3], 1
    %s1968 = scalar_lea.sflag [#allocation3], 1
    %1969 = vsyncpa %s1968, 1
    %1970 = vsyncpa [#allocation6], 1
    %s1971 = scalar_lea.sflag [#allocation6], 1
    %1972 = vsyncpa %s1971, 1
    %1973 = vsyncpa [#allocation9], 1
    %1974 = vsyncpa [#allocation12], 1
    %1975 = vsyncpa [#allocation4], 1
    %s1976 = scalar_lea.sflag [#allocation4], 1
    %1977 = vsyncpa %s1976, 1

</llo_original>
